<compile_context>
chip_gen: v6e
topology: v6e:2x2x1
jax: 0.10.0
libtpu: 0.0.40
codegen_flags: <defaults>
</compile_context>

<pallas_src>
import math
from functools import partial

import numpy as np

import jax
import jax.numpy as jnp
from jax.experimental import pallas as pl
from jax.experimental.pallas import tpu as pltpu


# ---------------------------------------------------------------------------
# Parameter construction (deterministic, synthetic — no checkpoint load)
# ---------------------------------------------------------------------------
def make_params(key, hidden_size):
    F = hidden_size
    ks = jax.random.split(key, 12)

    def xavier(k, fan_in, fan_out):
        bound = math.sqrt(6.0 / (fan_in + fan_out))
        return jax.random.uniform(k, (fan_in, fan_out), jnp.float32, -bound, bound)

    def lin_bias(k, fan_in, fan_out):
        bound = 1.0 / math.sqrt(fan_in)
        return jax.random.uniform(k, (1, fan_out), jnp.float32, -bound, bound)

    params = {
        # to_v / to_qk: xavier_uniform weights (as in _reset_parameters)
        "w_v":   xavier(ks[0], F, F),
        "b_v":   lin_bias(ks[1], F, F),
        "w_qk":  xavier(ks[2], F, 2 * F),
        "b_qk":  lin_bias(ks[3], F, 2 * F),
        # proj_new (Linear F->F)
        "w_p":   xavier(ks[4], F, F),
        "b_p":   lin_bias(ks[5], F, F),
        # norm1
        "g1":    jnp.ones((1, F), jnp.float32),
        "be1":   jnp.zeros((1, F), jnp.float32),
        # out_proj: Linear F->4F, GELU, Linear 4F->F
        "w_1":   xavier(ks[6], F, 4 * F),
        "b_1":   lin_bias(ks[7], F, 4 * F),
        "w_2":   xavier(ks[8], 4 * F, F),
        "b_2":   lin_bias(ks[9], 4 * F, F),
        # norm2
        "g2":    jnp.ones((1, F), jnp.float32),
        "be2":   jnp.zeros((1, F), jnp.float32),
    }
    return params


# ---------------------------------------------------------------------------
# Small helpers
# ---------------------------------------------------------------------------
def _round_up(x, m):
    return (x + m - 1) // m * m


def _layernorm(x, g, b, eps=1e-5):
    mu = jnp.mean(x, axis=-1, keepdims=True)
    var = jnp.mean((x - mu) * (x - mu), axis=-1, keepdims=True)
    return (x - mu) * jax.lax.rsqrt(var + eps) * g + b


def _prepare_kernel_params(params, num_heads, scale, compute_dtype):
    """Split QKV / proj weights per head and fold the attention scale into Q.

    Returned tuple order matches the kernel's ref arguments.
    Matmul weights are cast to `compute_dtype` at the boundary (bf16 on
    v6e/v7x halves weight DMA/VMEM); biases / LN params stay float32.
    """
    F = params["w_v"].shape[0]
    H = num_heads
    D = F // H

    def split_w(w):            # (F, H*D) -> (H, F, D), column h*D+d -> [h, :, d]
        return jnp.transpose(w.reshape(F, H, D), (1, 0, 2))

    def split_b(b):            # (1, H*D) -> (H, 1, D)
        return b.reshape(H, D)[:, None, :]

    def wcast(w):
        return w.astype(compute_dtype)

    wq = params["w_qk"][:, :F] * scale    # fold softmax scale into the Q proj
    bq = params["b_qk"][:, :F] * scale
    wk = params["w_qk"][:, F:]
    bk = params["b_qk"][:, F:]

    return (
        wcast(split_w(wq)),               split_b(bq),
        wcast(split_w(wk)),               split_b(bk),
        wcast(split_w(params["w_v"])),    split_b(params["b_v"]),
        wcast(params["w_p"].reshape(H, D, F)), params["b_p"],
        params["g1"], params["be1"],
        wcast(params["w_1"]), params["b_1"],
        wcast(params["w_2"]), params["b_2"],
        params["g2"], params["be2"],
    )


# ---------------------------------------------------------------------------
# Pallas kernel: one query-row tile of the flattened batch per grid step
# ---------------------------------------------------------------------------
def _make_kernel(num_heads, tq, compute_dtype):
    H = num_heads

    def kernel(x_ref, mask_ref,
               wq_ref, bq_ref, wk_ref, bk_ref, wv_ref, bv_ref,
               wp_ref, bp_ref, g1_ref, be1_ref,
               w1_ref, b1_ref, w2_ref, b2_ref, g2_ref, be2_ref,
               o_ref):
        cd = compute_dtype
        f32 = jnp.float32
        n_all, feat = x_ref.shape                     # (N_pad, F)

        row0 = pl.multiple_of(pl.program_id(0) * tq, 8)

        x_all = x_ref[...]                            # all node rows (keys/values)
        x_q = x_ref[pl.ds(row0, tq), :]               # this step's query rows
        addmask = mask_ref[...]                       # (TQ, N_pad) additive 0/-1e30

        xq_c = x_q.astype(cd)
        xk_c = x_all.astype(cd)

        # --- head-batched QKV projections (one dot_general each; the
        #     attention scale is already folded into wq/bq host-side) ------
        xq_b = jnp.broadcast_to(xq_c[None], (H, tq, feat))
        xk_b = jnp.broadcast_to(xk_c[None], (H, n_all, feat))

        q3 = jnp.einsum("hqf,hfd->hqd", xq_b, wq_ref[...],
                        preferred_element_type=f32) + bq_ref[...]   # (H,TQ,D)
        k3 = jnp.einsum("hkf,hfd->hkd", xk_b, wk_ref[...],
                        preferred_element_type=f32) + bk_ref[...]   # (H,NP,D)
        v3 = jnp.einsum("hkf,hfd->hkd", xk_b, wv_ref[...],
                        preferred_element_type=f32) + bv_ref[...]   # (H,NP,D)

        # --- all heads' attention in single batched dot_generals -----------
        s = jnp.einsum("hqd,hkd->hqk", q3.astype(cd), k3.astype(cd),
                       preferred_element_type=f32)                  # (H,TQ,NP)
        s = s + addmask[None]                 # block-diagonal segment mask
        m = jnp.max(s, axis=-1, keepdims=True)
        p = jnp.exp(s - m)
        denom = jnp.sum(p, axis=-1, keepdims=True)
        attn = p * pl.reciprocal(denom, approx=True)  # EUP slot, ~free

        o3 = jnp.einsum("hqk,hkd->hqd", attn.astype(cd), v3.astype(cd),
                        preferred_element_type=f32)                 # (H,TQ,D)

        # --- proj_new fused with the head merge:
        #     h_new = sum_h o3[h] @ Wp[h*D:(h+1)*D, :]  (+ bias) ------------
        h_new = jnp.sum(
            jnp.einsum("hqd,hdf->hqf", o3.astype(cd), wp_ref[...],
                       preferred_element_type=f32),
            axis=0) + bp_ref[...]                                   # (TQ,F)

        h1 = _layernorm(x_q + h_new, g1_ref[...], be1_ref[...])

        # --- MLP: Linear -> GELU(exact erf) -> Linear + residual + norm2 ---
        ff = jnp.dot(h1.astype(cd), w1_ref[...],
                     preferred_element_type=f32) + b1_ref[...]      # (TQ,4F)
        ff = 0.5 * ff * (1.0 + jax.lax.erf(ff * jnp.float32(1.0 / math.sqrt(2.0))))
        ff = jnp.dot(ff.astype(cd), w2_ref[...],
                     preferred_element_type=f32) + b2_ref[...]      # (TQ,F)

        o_ref[...] = _layernorm(h1 + ff, g2_ref[...], be2_ref[...])

    return kernel


# ---------------------------------------------------------------------------
# Wrapper: flatten/pad batch + segment mask (all jnp, jitted) -> pallas_call
# ---------------------------------------------------------------------------
@partial(jax.jit, static_argnames=("num_heads", "compute_dtype"))
def transformer_layer_forward(h_n, num_query_cumsum, params, num_heads,
                              compute_dtype=jnp.float32):
    h_n = h_n.astype(jnp.float32)
    cumsum = jnp.asarray(num_query_cumsum).astype(jnp.int32)
    N, F = h_n.shape
    H = num_heads
    D = F // H
    scale = D ** (-0.5)

    # Whole batch on one flattened node axis; a grid step handles one query
    # row tile (keeps the grid >= 2 for big batches so both v7x TCs get work).
    TQ = min(128, _round_up(N, 8))
    N_pad = _round_up(N, TQ)
    grid = (N_pad // TQ,)

    x_pad = jnp.pad(h_n, ((0, N_pad - N), (0, 0)))

    # Segment id per node row; padded rows get segment id B, so every score
    # row has at least one unmasked (finite) entry -> no NaN. Padded-row
    # outputs are sliced off below (do not read them if this gets fused).
    node = jnp.arange(N_pad, dtype=jnp.int32)
    seg = jnp.sum(node[:, None] >= cumsum[None, 1:], axis=1).astype(jnp.int32)
    addmask = jnp.where(seg[:, None] == seg[None, :],
                        jnp.float32(0.0), jnp.float32(-1e30))

    kparams = _prepare_kernel_params(params, H, scale, compute_dtype)
    kernel = _make_kernel(H, TQ, compute_dtype)

    def _const_spec(arr):
        nd = arr.ndim
        return pl.BlockSpec(arr.shape, lambda i, _nd=nd: (0,) * _nd)

    in_specs = [
        pl.BlockSpec((N_pad, F), lambda i: (0, 0)),    # x: full, resident
        pl.BlockSpec((TQ, N_pad), lambda i: (i, 0)),   # additive mask tile
    ] + [_const_spec(p) for p in kparams]

    out_spec = pl.BlockSpec((TQ, F), lambda i: (i, 0))

    # TODO(synk): for large hidden sizes on v7x (64 MiB VMEM), single-buffer
    # the invariant weight BlockSpecs (pl.Buffered) and set vmem_limit_bytes.
    out_pad = pl.pallas_call(
        kernel,
        out_shape=jax.ShapeDtypeStruct((N_pad, F), jnp.float32),
        grid=grid,
        in_specs=in_specs,
        out_specs=out_spec,
        compiler_params=pltpu.CompilerParams(
            dimension_semantics=("parallel",)),
    )(x_pad, addmask, *kparams)

    return out_pad[:N]


# ---------------------------------------------------------------------------
# Pure-numpy reference (same math, no padding tricks) for correctness check
# ---------------------------------------------------------------------------
def reference_forward(h_n, num_query_cumsum, params, num_heads):
    p = {k: np.asarray(v, np.float64) for k, v in params.items()}
    x = np.asarray(h_n, np.float64)
    cumsum = np.asarray(num_query_cumsum, np.int64)
    N, F = x.shape
    B = len(cumsum) - 1
    d = F // num_heads
    scale = d ** (-0.5)
    erf_vec = np.vectorize(math.erf)

    v = x @ p["w_v"] + p["b_v"]
    qk = x @ p["w_qk"] + p["b_qk"]
    q, k = qk[:, :F], qk[:, F:]

    h_attn = np.zeros_like(x)
    for i in range(B):
        s, e = int(cumsum[i]), int(cumsum[i + 1])
        qi, ki, vi = q[s:e], k[s:e], v[s:e]
        for h in range(num_heads):
            lo, hi = h * d, (h + 1) * d
            dot = (qi[:, lo:hi] @ ki[:, lo:hi].T) * scale
            dot = dot - dot.max(-1, keepdims=True)
            pr = np.exp(dot)
            pr = pr / pr.sum(-1, keepdims=True)
            h_attn[s:e, lo:hi] = pr @ vi[:, lo:hi]

    def ln(z, g, b, eps=1e-5):
        mu = z.mean(-1, keepdims=True)
        var = ((z - mu) ** 2).mean(-1, keepdims=True)
        return (z - mu) / np.sqrt(var + eps) * g + b

    h_new = h_attn @ p["w_p"] + p["b_p"]
    h1 = ln(x + h_new, p["g1"], p["be1"])
    ff = h1 @ p["w_1"] + p["b_1"]
    ff = 0.5 * ff * (1.0 + erf_vec(ff / math.sqrt(2.0)))
    ff = ff @ p["w_2"] + p["b_2"]
    return ln(h1 + ff, p["g2"], p["be2"])


# ---------------------------------------------------------------------------
if __name__ == "__main__":
    hidden_size = 32
    num_heads = 4
    dropout = 0.1  # identity at inference

    key = jax.random.PRNGKey(0)
    pkey, xkey = jax.random.split(key)
    params = make_params(pkey, hidden_size)

    # batch of 2 graphs with 3 and 5 query nodes -> N = 8 total nodes
    num_query_cumsum = np.array([0, 3, 8], np.int32)
    N = int(num_query_cumsum[-1])
    h_n = jax.random.normal(xkey, (N, hidden_size), jnp.float32)

    ref = reference_forward(np.asarray(h_n), num_query_cumsum, params, num_heads)

    # f32 MXU path (safe default, incl. v5e). Tolerance accounts for the
    # approximate EUP reciprocal in the softmax normalization.
    out_f32 = jax.block_until_ready(
        transformer_layer_forward(h_n, num_query_cumsum, params,
                                  num_heads=num_heads,
                                  compute_dtype=jnp.float32))
    assert out_f32.shape == (N, hidden_size)
    np.testing.assert_allclose(np.asarray(out_f32), ref, rtol=1e-2, atol=1e-2)

    # bf16-fed MXU path (v6e/v7x optimization); element-wise math stays f32.
    out_bf16 = jax.block_until_ready(
        transformer_layer_forward(h_n, num_query_cumsum, params,
                                  num_heads=num_heads,
                                  compute_dtype=jnp.bfloat16))
    np.testing.assert_allclose(np.asarray(out_bf16), ref, rtol=1e-1, atol=1e-1)

    print("KERNEL_OK")
</pallas_src>

<mosaic_0001>
module attributes {stable_mosaic.version = 11 : i64} {
  func.func @kernel(%arg0: i32, %arg1: memref<8x32xf32, #tpu.memory_space<vmem>>, %arg2: memref<8x8xf32, #tpu.memory_space<vmem>>, %arg3: memref<4x32x8xf32, #tpu.memory_space<vmem>>, %arg4: memref<4x1x8xf32, #tpu.memory_space<vmem>>, %arg5: memref<4x32x8xf32, #tpu.memory_space<vmem>>, %arg6: memref<4x1x8xf32, #tpu.memory_space<vmem>>, %arg7: memref<4x32x8xf32, #tpu.memory_space<vmem>>, %arg8: memref<4x1x8xf32, #tpu.memory_space<vmem>>, %arg9: memref<4x8x32xf32, #tpu.memory_space<vmem>>, %arg10: memref<1x32xf32, #tpu.memory_space<vmem>>, %arg11: memref<1x32xf32, #tpu.memory_space<vmem>>, %arg12: memref<1x32xf32, #tpu.memory_space<vmem>>, %arg13: memref<32x128xf32, #tpu.memory_space<vmem>>, %arg14: memref<1x128xf32, #tpu.memory_space<vmem>>, %arg15: memref<128x32xf32, #tpu.memory_space<vmem>>, %arg16: memref<1x32xf32, #tpu.memory_space<vmem>>, %arg17: memref<1x32xf32, #tpu.memory_space<vmem>>, %arg18: memref<1x32xf32, #tpu.memory_space<vmem>>, %arg19: memref<8x32xf32, #tpu.memory_space<vmem>>) attributes {dimension_semantics = [#tpu.dimension_semantics<parallel>], iteration_bounds = array<i64: 1>, scalar_prefetch = 0 : i64, scratch_operands = 0 : i64, tpu.core_type = #tpu.core_type<tc>, window_params = [{pipeline_mode = #tpu.pipeline_mode<synchronous>, transform_indices = @transform_0, window_bounds = array<i64: 8, 32>}, {transform_indices = @transform_1, window_bounds = array<i64: 8, 8>}, {pipeline_mode = #tpu.pipeline_mode<synchronous>, transform_indices = @transform_2, window_bounds = array<i64: 4, 32, 8>}, {pipeline_mode = #tpu.pipeline_mode<synchronous>, transform_indices = @transform_3, window_bounds = array<i64: 4, 1, 8>}, {pipeline_mode = #tpu.pipeline_mode<synchronous>, transform_indices = @transform_4, window_bounds = array<i64: 4, 32, 8>}, {pipeline_mode = #tpu.pipeline_mode<synchronous>, transform_indices = @transform_5, window_bounds = array<i64: 4, 1, 8>}, {pipeline_mode = #tpu.pipeline_mode<synchronous>, transform_indices = @transform_6, window_bounds = array<i64: 4, 32, 8>}, {pipeline_mode = #tpu.pipeline_mode<synchronous>, transform_indices = @transform_7, window_bounds = array<i64: 4, 1, 8>}, {pipeline_mode = #tpu.pipeline_mode<synchronous>, transform_indices = @transform_8, window_bounds = array<i64: 4, 8, 32>}, {pipeline_mode = #tpu.pipeline_mode<synchronous>, transform_indices = @transform_9, window_bounds = array<i64: 1, 32>}, {pipeline_mode = #tpu.pipeline_mode<synchronous>, transform_indices = @transform_10, window_bounds = array<i64: 1, 32>}, {pipeline_mode = #tpu.pipeline_mode<synchronous>, transform_indices = @transform_11, window_bounds = array<i64: 1, 32>}, {pipeline_mode = #tpu.pipeline_mode<synchronous>, transform_indices = @transform_12, window_bounds = array<i64: 32, 128>}, {pipeline_mode = #tpu.pipeline_mode<synchronous>, transform_indices = @transform_13, window_bounds = array<i64: 1, 128>}, {pipeline_mode = #tpu.pipeline_mode<synchronous>, transform_indices = @transform_14, window_bounds = array<i64: 128, 32>}, {pipeline_mode = #tpu.pipeline_mode<synchronous>, transform_indices = @transform_15, window_bounds = array<i64: 1, 32>}, {pipeline_mode = #tpu.pipeline_mode<synchronous>, transform_indices = @transform_16, window_bounds = array<i64: 1, 32>}, {pipeline_mode = #tpu.pipeline_mode<synchronous>, transform_indices = @transform_17, window_bounds = array<i64: 1, 32>}, {transform_indices = @transform_18, window_bounds = array<i64: 8, 32>}]} {
    %c8_i32 = arith.constant 8 : i32
    %0 = arith.muli %arg0, %c8_i32 : i32
    %1 = tpu.assume_multiple %0, 8 : i32
    %c0 = arith.constant 0 : index
    %c0_0 = arith.constant 0 : index
    %2 = vector.load %arg1[%c0, %c0_0] : memref<8x32xf32, #tpu.memory_space<vmem>>, vector<8x32xf32>
    %3 = arith.index_cast %1 : i32 to index
    %c0_1 = arith.constant 0 : index
    %4 = vector.load %arg1[%3, %c0_1] : memref<8x32xf32, #tpu.memory_space<vmem>>, vector<8x32xf32>
    %c0_2 = arith.constant 0 : index
    %c0_3 = arith.constant 0 : index
    %5 = vector.load %arg2[%c0_2, %c0_3] : memref<8x8xf32, #tpu.memory_space<vmem>>, vector<8x8xf32>
    %6 = vector.shape_cast %4 : vector<8x32xf32> to vector<1x8x32xf32>
    %7 = vector.shape_cast %6 : vector<1x8x32xf32> to vector<1x8x32xf32>
    %8 = vector.broadcast %7 : vector<1x8x32xf32> to vector<4x8x32xf32>
    %9 = vector.shape_cast %2 : vector<8x32xf32> to vector<1x8x32xf32>
    %10 = vector.shape_cast %9 : vector<1x8x32xf32> to vector<1x8x32xf32>
    %11 = vector.broadcast %10 : vector<1x8x32xf32> to vector<4x8x32xf32>
    %c0_4 = arith.constant 0 : index
    %c0_5 = arith.constant 0 : index
    %c0_6 = arith.constant 0 : index
    %12 = vector.load %arg3[%c0_4, %c0_5, %c0_6] : memref<4x32x8xf32, #tpu.memory_space<vmem>>, vector<4x32x8xf32>
    "tpu.trace_start"() <{level = 10 : i32, message = "hqf,hfd->hqd"}> : () -> ()
    %cst = arith.constant dense<0.000000e+00> : vector<4x8x8xf32>
    %13 = tpu.matmul %8, %12, %cst {dimension_numbers = #tpu.dot_dimension_numbers<[2], [1], [1], [2], [0, 0, 0, 1, 1, 2], [0], [0]>} : vector<4x8x32xf32>, vector<4x32x8xf32>, vector<4x8x8xf32> -> vector<4x8x8xf32>
    "tpu.trace_stop"() : () -> ()
    %c0_7 = arith.constant 0 : index
    %c0_8 = arith.constant 0 : index
    %c0_9 = arith.constant 0 : index
    %14 = vector.load %arg4[%c0_7, %c0_8, %c0_9] : memref<4x1x8xf32, #tpu.memory_space<vmem>>, vector<4x1x8xf32>
    %15 = vector.broadcast %14 : vector<4x1x8xf32> to vector<4x8x8xf32>
    %16 = arith.addf %13, %15 : vector<4x8x8xf32>
    %c0_10 = arith.constant 0 : index
    %c0_11 = arith.constant 0 : index
    %c0_12 = arith.constant 0 : index
    %17 = vector.load %arg5[%c0_10, %c0_11, %c0_12] : memref<4x32x8xf32, #tpu.memory_space<vmem>>, vector<4x32x8xf32>
    "tpu.trace_start"() <{level = 10 : i32, message = "hkf,hfd->hkd"}> : () -> ()
    %cst_13 = arith.constant dense<0.000000e+00> : vector<4x8x8xf32>
    %18 = tpu.matmul %11, %17, %cst_13 {dimension_numbers = #tpu.dot_dimension_numbers<[2], [1], [1], [2], [0, 0, 0, 1, 1, 2], [0], [0]>} : vector<4x8x32xf32>, vector<4x32x8xf32>, vector<4x8x8xf32> -> vector<4x8x8xf32>
    "tpu.trace_stop"() : () -> ()
    %c0_14 = arith.constant 0 : index
    %c0_15 = arith.constant 0 : index
    %c0_16 = arith.constant 0 : index
    %19 = vector.load %arg6[%c0_14, %c0_15, %c0_16] : memref<4x1x8xf32, #tpu.memory_space<vmem>>, vector<4x1x8xf32>
    %20 = vector.broadcast %19 : vector<4x1x8xf32> to vector<4x8x8xf32>
    %21 = arith.addf %18, %20 : vector<4x8x8xf32>
    %c0_17 = arith.constant 0 : index
    %c0_18 = arith.constant 0 : index
    %c0_19 = arith.constant 0 : index
    %22 = vector.load %arg7[%c0_17, %c0_18, %c0_19] : memref<4x32x8xf32, #tpu.memory_space<vmem>>, vector<4x32x8xf32>
    "tpu.trace_start"() <{level = 10 : i32, message = "hkf,hfd->hkd"}> : () -> ()
    %cst_20 = arith.constant dense<0.000000e+00> : vector<4x8x8xf32>
    %23 = tpu.matmul %11, %22, %cst_20 {dimension_numbers = #tpu.dot_dimension_numbers<[2], [1], [1], [2], [0, 0, 0, 1, 1, 2], [0], [0]>} : vector<4x8x32xf32>, vector<4x32x8xf32>, vector<4x8x8xf32> -> vector<4x8x8xf32>
    "tpu.trace_stop"() : () -> ()
    %c0_21 = arith.constant 0 : index
    %c0_22 = arith.constant 0 : index
    %c0_23 = arith.constant 0 : index
    %24 = vector.load %arg8[%c0_21, %c0_22, %c0_23] : memref<4x1x8xf32, #tpu.memory_space<vmem>>, vector<4x1x8xf32>
    %25 = vector.broadcast %24 : vector<4x1x8xf32> to vector<4x8x8xf32>
    %26 = arith.addf %23, %25 : vector<4x8x8xf32>
    "tpu.trace_start"() <{level = 10 : i32, message = "hqd,hkd->hqk"}> : () -> ()
    %cst_24 = arith.constant dense<0.000000e+00> : vector<4x8x8xf32>
    %27 = tpu.matmul %16, %21, %cst_24 {dimension_numbers = #tpu.dot_dimension_numbers<[2], [2], [1], [1], [0, 0, 0, 1, 1, 1], [0], [0]>} : vector<4x8x8xf32>, vector<4x8x8xf32>, vector<4x8x8xf32> -> vector<4x8x8xf32>
    "tpu.trace_stop"() : () -> ()
    %28 = vector.shape_cast %5 : vector<8x8xf32> to vector<1x8x8xf32>
    %29 = vector.broadcast %28 : vector<1x8x8xf32> to vector<4x8x8xf32>
    %30 = arith.addf %27, %29 : vector<4x8x8xf32>
    %cst_25 = arith.constant dense<0xFF800000> : vector<4x8xf32>
    %31 = vector.multi_reduction <maximumf>, %30, %cst_25 [2] : vector<4x8x8xf32> to vector<4x8xf32>
    %32 = vector.shape_cast %31 : vector<4x8xf32> to vector<4x8x1xf32>
    %33 = vector.broadcast %32 : vector<4x8x1xf32> to vector<4x8x8xf32>
    %34 = arith.subf %30, %33 : vector<4x8x8xf32>
    %35 = math.exp %34 : vector<4x8x8xf32>
    %cst_26 = arith.constant dense<0.000000e+00> : vector<4x8xf32>
    %36 = vector.multi_reduction <add>, %35, %cst_26 [2] : vector<4x8x8xf32> to vector<4x8xf32>
    %37 = vector.shape_cast %36 : vector<4x8xf32> to vector<4x8x1xf32>
    %38 = tpu.reciprocal %37 {approx = true} : vector<4x8x1xf32> -> vector<4x8x1xf32>
    %39 = vector.broadcast %38 : vector<4x8x1xf32> to vector<4x8x8xf32>
    %40 = arith.mulf %35, %39 : vector<4x8x8xf32>
    "tpu.trace_start"() <{level = 10 : i32, message = "hqk,hkd->hqd"}> : () -> ()
    %cst_27 = arith.constant dense<0.000000e+00> : vector<4x8x8xf32>
    %41 = tpu.matmul %40, %26, %cst_27 {dimension_numbers = #tpu.dot_dimension_numbers<[2], [1], [1], [2], [0, 0, 0, 1, 1, 2], [0], [0]>} : vector<4x8x8xf32>, vector<4x8x8xf32>, vector<4x8x8xf32> -> vector<4x8x8xf32>
    "tpu.trace_stop"() : () -> ()
    %c0_28 = arith.constant 0 : index
    %c0_29 = arith.constant 0 : index
    %c0_30 = arith.constant 0 : index
    %42 = vector.load %arg9[%c0_28, %c0_29, %c0_30] : memref<4x8x32xf32, #tpu.memory_space<vmem>>, vector<4x8x32xf32>
    "tpu.trace_start"() <{level = 10 : i32, message = "hqd,hdf->hqf"}> : () -> ()
    %cst_31 = arith.constant dense<0.000000e+00> : vector<4x8x32xf32>
    %43 = tpu.matmul %41, %42, %cst_31 {dimension_numbers = #tpu.dot_dimension_numbers<[2], [1], [1], [2], [0, 0, 0, 1, 1, 2], [0], [0]>} : vector<4x8x8xf32>, vector<4x8x32xf32>, vector<4x8x32xf32> -> vector<4x8x32xf32>
    "tpu.trace_stop"() : () -> ()
    %cst_32 = arith.constant dense<0.000000e+00> : vector<8x32xf32>
    %44 = vector.multi_reduction <add>, %43, %cst_32 [0] : vector<4x8x32xf32> to vector<8x32xf32>
    %c0_33 = arith.constant 0 : index
    %c0_34 = arith.constant 0 : index
    %45 = vector.load %arg10[%c0_33, %c0_34] : memref<1x32xf32, #tpu.memory_space<vmem>>, vector<1x32xf32>
    %46 = vector.broadcast %45 : vector<1x32xf32> to vector<8x32xf32>
    %47 = arith.addf %44, %46 : vector<8x32xf32>
    %48 = arith.addf %4, %47 : vector<8x32xf32>
    %c0_35 = arith.constant 0 : index
    %c0_36 = arith.constant 0 : index
    %49 = vector.load %arg11[%c0_35, %c0_36] : memref<1x32xf32, #tpu.memory_space<vmem>>, vector<1x32xf32>
    %c0_37 = arith.constant 0 : index
    %c0_38 = arith.constant 0 : index
    %50 = vector.load %arg12[%c0_37, %c0_38] : memref<1x32xf32, #tpu.memory_space<vmem>>, vector<1x32xf32>
    %cst_39 = arith.constant dense<0.000000e+00> : vector<8xf32>
    %51 = vector.multi_reduction <add>, %48, %cst_39 [1] : vector<8x32xf32> to vector<8xf32>
    %52 = vector.shape_cast %51 : vector<8xf32> to vector<8x1xf32>
    %cst_40 = arith.constant 3.200000e+01 : f32
    %53 = vector.broadcast %cst_40 : f32 to vector<8x1xf32>
    %54 = arith.divf %52, %53 : vector<8x1xf32>
    %55 = vector.broadcast %54 : vector<8x1xf32> to vector<8x32xf32>
    %56 = arith.subf %48, %55 : vector<8x32xf32>
    %57 = vector.broadcast %54 : vector<8x1xf32> to vector<8x32xf32>
    %58 = arith.subf %48, %57 : vector<8x32xf32>
    %59 = arith.mulf %56, %58 : vector<8x32xf32>
    %cst_41 = arith.constant dense<0.000000e+00> : vector<8xf32>
    %60 = vector.multi_reduction <add>, %59, %cst_41 [1] : vector<8x32xf32> to vector<8xf32>
    %61 = vector.shape_cast %60 : vector<8xf32> to vector<8x1xf32>
    %cst_42 = arith.constant 3.200000e+01 : f32
    %62 = vector.broadcast %cst_42 : f32 to vector<8x1xf32>
    %63 = arith.divf %61, %62 : vector<8x1xf32>
    %64 = vector.broadcast %54 : vector<8x1xf32> to vector<8x32xf32>
    %65 = arith.subf %48, %64 : vector<8x32xf32>
    %cst_43 = arith.constant 9.99999974E-6 : f32
    %66 = vector.broadcast %cst_43 : f32 to vector<8x1xf32>
    %67 = arith.addf %63, %66 : vector<8x1xf32>
    %68 = math.rsqrt %67 : vector<8x1xf32>
    %69 = vector.broadcast %68 : vector<8x1xf32> to vector<8x32xf32>
    %70 = arith.mulf %65, %69 : vector<8x32xf32>
    %71 = vector.broadcast %49 : vector<1x32xf32> to vector<8x32xf32>
    %72 = arith.mulf %70, %71 : vector<8x32xf32>
    %73 = vector.broadcast %50 : vector<1x32xf32> to vector<8x32xf32>
    %74 = arith.addf %72, %73 : vector<8x32xf32>
    %c0_44 = arith.constant 0 : index
    %c0_45 = arith.constant 0 : index
    %75 = vector.load %arg13[%c0_44, %c0_45] : memref<32x128xf32, #tpu.memory_space<vmem>>, vector<32x128xf32>
    %cst_46 = arith.constant dense<0.000000e+00> : vector<8x128xf32>
    %76 = tpu.matmul %74, %75, %cst_46 {dimension_numbers = #tpu.dot_dimension_numbers<[1], [0], [0], [1], [0, 0, 1, 1], [], []>} : vector<8x32xf32>, vector<32x128xf32>, vector<8x128xf32> -> vector<8x128xf32>
    %c0_47 = arith.constant 0 : index
    %c0_48 = arith.constant 0 : index
    %77 = vector.load %arg14[%c0_47, %c0_48] : memref<1x128xf32, #tpu.memory_space<vmem>>, vector<1x128xf32>
    %78 = vector.broadcast %77 : vector<1x128xf32> to vector<8x128xf32>
    %79 = arith.addf %76, %78 : vector<8x128xf32>
    %cst_49 = arith.constant 5.000000e-01 : f32
    %80 = vector.broadcast %cst_49 : f32 to vector<8x128xf32>
    %81 = arith.mulf %80, %79 : vector<8x128xf32>
    %cst_50 = arith.constant 0.707106769 : f32
    %82 = vector.broadcast %cst_50 : f32 to vector<8x128xf32>
    %83 = arith.mulf %79, %82 : vector<8x128xf32>
    %84 = math.erf %83 : vector<8x128xf32>
    %cst_51 = arith.constant 1.000000e+00 : f32
    %85 = vector.broadcast %cst_51 : f32 to vector<8x128xf32>
    %86 = arith.addf %85, %84 : vector<8x128xf32>
    %87 = arith.mulf %81, %86 : vector<8x128xf32>
    %c0_52 = arith.constant 0 : index
    %c0_53 = arith.constant 0 : index
    %88 = vector.load %arg15[%c0_52, %c0_53] : memref<128x32xf32, #tpu.memory_space<vmem>>, vector<128x32xf32>
    %cst_54 = arith.constant dense<0.000000e+00> : vector<8x32xf32>
    %89 = tpu.matmul %87, %88, %cst_54 {dimension_numbers = #tpu.dot_dimension_numbers<[1], [0], [0], [1], [0, 0, 1, 1], [], []>} : vector<8x128xf32>, vector<128x32xf32>, vector<8x32xf32> -> vector<8x32xf32>
    %c0_55 = arith.constant 0 : index
    %c0_56 = arith.constant 0 : index
    %90 = vector.load %arg16[%c0_55, %c0_56] : memref<1x32xf32, #tpu.memory_space<vmem>>, vector<1x32xf32>
    %91 = vector.broadcast %90 : vector<1x32xf32> to vector<8x32xf32>
    %92 = arith.addf %89, %91 : vector<8x32xf32>
    %93 = arith.addf %74, %92 : vector<8x32xf32>
    %c0_57 = arith.constant 0 : index
    %c0_58 = arith.constant 0 : index
    %94 = vector.load %arg17[%c0_57, %c0_58] : memref<1x32xf32, #tpu.memory_space<vmem>>, vector<1x32xf32>
    %c0_59 = arith.constant 0 : index
    %c0_60 = arith.constant 0 : index
    %95 = vector.load %arg18[%c0_59, %c0_60] : memref<1x32xf32, #tpu.memory_space<vmem>>, vector<1x32xf32>
    %cst_61 = arith.constant dense<0.000000e+00> : vector<8xf32>
    %96 = vector.multi_reduction <add>, %93, %cst_61 [1] : vector<8x32xf32> to vector<8xf32>
    %97 = vector.shape_cast %96 : vector<8xf32> to vector<8x1xf32>
    %cst_62 = arith.constant 3.200000e+01 : f32
    %98 = vector.broadcast %cst_62 : f32 to vector<8x1xf32>
    %99 = arith.divf %97, %98 : vector<8x1xf32>
    %100 = vector.broadcast %99 : vector<8x1xf32> to vector<8x32xf32>
    %101 = arith.subf %93, %100 : vector<8x32xf32>
    %102 = vector.broadcast %99 : vector<8x1xf32> to vector<8x32xf32>
    %103 = arith.subf %93, %102 : vector<8x32xf32>
    %104 = arith.mulf %101, %103 : vector<8x32xf32>
    %cst_63 = arith.constant dense<0.000000e+00> : vector<8xf32>
    %105 = vector.multi_reduction <add>, %104, %cst_63 [1] : vector<8x32xf32> to vector<8xf32>
    %106 = vector.shape_cast %105 : vector<8xf32> to vector<8x1xf32>
    %cst_64 = arith.constant 3.200000e+01 : f32
    %107 = vector.broadcast %cst_64 : f32 to vector<8x1xf32>
    %108 = arith.divf %106, %107 : vector<8x1xf32>
    %109 = vector.broadcast %99 : vector<8x1xf32> to vector<8x32xf32>
    %110 = arith.subf %93, %109 : vector<8x32xf32>
    %cst_65 = arith.constant 9.99999974E-6 : f32
    %111 = vector.broadcast %cst_65 : f32 to vector<8x1xf32>
    %112 = arith.addf %108, %111 : vector<8x1xf32>
    %113 = math.rsqrt %112 : vector<8x1xf32>
    %114 = vector.broadcast %113 : vector<8x1xf32> to vector<8x32xf32>
    %115 = arith.mulf %110, %114 : vector<8x32xf32>
    %116 = vector.broadcast %94 : vector<1x32xf32> to vector<8x32xf32>
    %117 = arith.mulf %115, %116 : vector<8x32xf32>
    %118 = vector.broadcast %95 : vector<1x32xf32> to vector<8x32xf32>
    %119 = arith.addf %117, %118 : vector<8x32xf32>
    %c0_66 = arith.constant 0 : index
    %c0_67 = arith.constant 0 : index
    %120 = vector.load %arg19[%c0_66, %c0_67] : memref<8x32xf32, #tpu.memory_space<vmem>>, vector<8x32xf32>
    tpu.vector_store %arg19[%c0_66, %c0_67], %119 {strides = array<i32>} : memref<8x32xf32, #tpu.memory_space<vmem>>, vector<8x32xf32>,
    return
  }
  func.func @transform_0(%arg0: i32) -> (i32, i32) {
    %c0_i32 = arith.constant 0 : i32
    %c0_i32_0 = arith.constant 0 : i32
    %c0_i32_1 = arith.constant 0 : i32
    return %c0_i32, %c0_i32_0 : i32, i32
  }
  func.func @transform_1(%arg0: i32) -> (i32, i32) {
    %c0_i32 = arith.constant 0 : i32
    %c0_i32_0 = arith.constant 0 : i32
    return %arg0, %c0_i32 : i32, i32
  }
  func.func @transform_2(%arg0: i32) -> (i32, i32, i32) {
    %c0_i32 = arith.constant 0 : i32
    %c0_i32_0 = arith.constant 0 : i32
    %c0_i32_1 = arith.constant 0 : i32
    %c0_i32_2 = arith.constant 0 : i32
    return %c0_i32, %c0_i32_0, %c0_i32_1 : i32, i32, i32
  }
  func.func @transform_3(%arg0: i32) -> (i32, i32, i32) {
    %c0_i32 = arith.constant 0 : i32
    %c0_i32_0 = arith.constant 0 : i32
    %c0_i32_1 = arith.constant 0 : i32
    %c0_i32_2 = arith.constant 0 : i32
    return %c0_i32, %c0_i32_0, %c0_i32_1 : i32, i32, i32
  }
  func.func @transform_4(%arg0: i32) -> (i32, i32, i32) {
    %c0_i32 = arith.constant 0 : i32
    %c0_i32_0 = arith.constant 0 : i32
    %c0_i32_1 = arith.constant 0 : i32
    %c0_i32_2 = arith.constant 0 : i32
    return %c0_i32, %c0_i32_0, %c0_i32_1 : i32, i32, i32
  }
  func.func @transform_5(%arg0: i32) -> (i32, i32, i32) {
    %c0_i32 = arith.constant 0 : i32
    %c0_i32_0 = arith.constant 0 : i32
    %c0_i32_1 = arith.constant 0 : i32
    %c0_i32_2 = arith.constant 0 : i32
    return %c0_i32, %c0_i32_0, %c0_i32_1 : i32, i32, i32
  }
  func.func @transform_6(%arg0: i32) -> (i32, i32, i32) {
    %c0_i32 = arith.constant 0 : i32
    %c0_i32_0 = arith.constant 0 : i32
    %c0_i32_1 = arith.constant 0 : i32
    %c0_i32_2 = arith.constant 0 : i32
    return %c0_i32, %c0_i32_0, %c0_i32_1 : i32, i32, i32
  }
  func.func @transform_7(%arg0: i32) -> (i32, i32, i32) {
    %c0_i32 = arith.constant 0 : i32
    %c0_i32_0 = arith.constant 0 : i32
    %c0_i32_1 = arith.constant 0 : i32
    %c0_i32_2 = arith.constant 0 : i32
    return %c0_i32, %c0_i32_0, %c0_i32_1 : i32, i32, i32
  }
  func.func @transform_8(%arg0: i32) -> (i32, i32, i32) {
    %c0_i32 = arith.constant 0 : i32
    %c0_i32_0 = arith.constant 0 : i32
    %c0_i32_1 = arith.constant 0 : i32
    %c0_i32_2 = arith.constant 0 : i32
    return %c0_i32, %c0_i32_0, %c0_i32_1 : i32, i32, i32
  }
  func.func @transform_9(%arg0: i32) -> (i32, i32) {
    %c0_i32 = arith.constant 0 : i32
    %c0_i32_0 = arith.constant 0 : i32
    %c0_i32_1 = arith.constant 0 : i32
    return %c0_i32, %c0_i32_0 : i32, i32
  }
  func.func @transform_10(%arg0: i32) -> (i32, i32) {
    %c0_i32 = arith.constant 0 : i32
    %c0_i32_0 = arith.constant 0 : i32
    %c0_i32_1 = arith.constant 0 : i32
    return %c0_i32, %c0_i32_0 : i32, i32
  }
  func.func @transform_11(%arg0: i32) -> (i32, i32) {
    %c0_i32 = arith.constant 0 : i32
    %c0_i32_0 = arith.constant 0 : i32
    %c0_i32_1 = arith.constant 0 : i32
    return %c0_i32, %c0_i32_0 : i32, i32
  }
  func.func @transform_12(%arg0: i32) -> (i32, i32) {
    %c0_i32 = arith.constant 0 : i32
    %c0_i32_0 = arith.constant 0 : i32
    %c0_i32_1 = arith.constant 0 : i32
    return %c0_i32, %c0_i32_0 : i32, i32
  }
  func.func @transform_13(%arg0: i32) -> (i32, i32) {
    %c0_i32 = arith.constant 0 : i32
    %c0_i32_0 = arith.constant 0 : i32
    %c0_i32_1 = arith.constant 0 : i32
    return %c0_i32, %c0_i32_0 : i32, i32
  }
  func.func @transform_14(%arg0: i32) -> (i32, i32) {
    %c0_i32 = arith.constant 0 : i32
    %c0_i32_0 = arith.constant 0 : i32
    %c0_i32_1 = arith.constant 0 : i32
    return %c0_i32, %c0_i32_0 : i32, i32
  }
  func.func @transform_15(%arg0: i32) -> (i32, i32) {
    %c0_i32 = arith.constant 0 : i32
    %c0_i32_0 = arith.constant 0 : i32
    %c0_i32_1 = arith.constant 0 : i32
    return %c0_i32, %c0_i32_0 : i32, i32
  }
  func.func @transform_16(%arg0: i32) -> (i32, i32) {
    %c0_i32 = arith.constant 0 : i32
    %c0_i32_0 = arith.constant 0 : i32
    %c0_i32_1 = arith.constant 0 : i32
    return %c0_i32, %c0_i32_0 : i32, i32
  }
  func.func @transform_17(%arg0: i32) -> (i32, i32) {
    %c0_i32 = arith.constant 0 : i32
    %c0_i32_0 = arith.constant 0 : i32
    %c0_i32_1 = arith.constant 0 : i32
    return %c0_i32, %c0_i32_0 : i32, i32
  }
  func.func @transform_18(%arg0: i32) -> (i32, i32) {
    %c0_i32 = arith.constant 0 : i32
    %c0_i32_0 = arith.constant 0 : i32
    return %arg0, %c0_i32 : i32, i32
  }
}

</mosaic_0001>

<llo_original>
// kernel: transformer_layer_forward.1
$region0: #{transformer_layer_forward.1}
  #allocation0 [shape = 'u32[]', space=smem, size = 0x4, offset = 0x4, fixed_abs, tag = 'smem constant byte address 0x4 - core index']
  #allocation1 [shape = 'u32[144,128]{1,0:T(1,128)}', space=vmem, size = 0x12000, scoped, tag = 'internal scratch']
  %s0 = inlined_call_operand.vmem [shape: f32[8,32], index: 0, kind: input, shape index: {}]
  %s1 = inlined_call_operand.vmem [shape: f32[8,8], index: 1, kind: input, shape index: {}]
  %s2 = inlined_call_operand.vmem [shape: f32[4,32,8], index: 2, kind: input, shape index: {}]
  %s3 = inlined_call_operand.vmem [shape: f32[4,1,8], index: 3, kind: input, shape index: {}]
  %s4 = inlined_call_operand.vmem [shape: f32[4,32,8], index: 4, kind: input, shape index: {}]
  %s5 = inlined_call_operand.vmem [shape: f32[4,1,8], index: 5, kind: input, shape index: {}]
  %s6 = inlined_call_operand.vmem [shape: f32[4,32,8], index: 6, kind: input, shape index: {}]
  %s7 = inlined_call_operand.vmem [shape: f32[4,1,8], index: 7, kind: input, shape index: {}]
  %s8 = inlined_call_operand.vmem [shape: f32[4,8,32], index: 8, kind: input, shape index: {}]
  %s9 = inlined_call_operand.vmem [shape: f32[1,32], index: 9, kind: input, shape index: {}]
  %s10 = inlined_call_operand.vmem [shape: f32[1,32], index: 10, kind: input, shape index: {}]
  %s11 = inlined_call_operand.vmem [shape: f32[1,32], index: 11, kind: input, shape index: {}]
  %s12 = inlined_call_operand.vmem [shape: f32[32,128], index: 12, kind: input, shape index: {}]
  %s13 = inlined_call_operand.vmem [shape: f32[1,128], index: 13, kind: input, shape index: {}]
  %s14 = inlined_call_operand.vmem [shape: f32[128,32], index: 14, kind: input, shape index: {}]
  %s15 = inlined_call_operand.vmem [shape: f32[1,32], index: 15, kind: input, shape index: {}]
  %s16 = inlined_call_operand.vmem [shape: f32[1,32], index: 16, kind: input, shape index: {}]
  %s17 = inlined_call_operand.vmem [shape: f32[1,32], index: 17, kind: input, shape index: {}]
  %s18 = inlined_call_operand.hbm [shape: f32[8,32], index: 18, kind: output, shape index: {}]
  %s19 = sld [smem:[#allocation0]]
  $region82: #{transformer_layer_forward.1} parent=0
    _
  %s21 = ssub.s32 1, %s19
  %s22 = scalar_select 0, %s21, %s19
  $region1: #{transformer_layer_forward.1} parent=0
    #allocation2 [shape = 'u8[4096]{0}', space=vmem, size = 0x1000, scoped, tag = 'output window, operand 0, single buffered']
    #allocation3 [shape = 's32[1]{0}', space=sflag, size = 0x4, scoped, tag = 'scoped memory for transformer_layer_forward.1']
    %23 = vsyncpa [#allocation3], 0
    // Predicated region
    $region2: #{transformer_layer_forward.1} parent=1 // pred_check
      _
    $region3: #{transformer_layer_forward.1} parent=1 // pred_check_branch
      %25 = sbr.rel (0) target = $region5
    $region4: #{transformer_layer_forward.1} parent=1 // pred_region
      _
    $region5: #{transformer_layer_forward.1} parent=1 // pred_fallthru
      _
    // Predicated region
    $region6: #{transformer_layer_forward.1} parent=1 // pred_check
      _
    $region7: #{transformer_layer_forward.1} parent=1 // pred_check_branch
      %27 = sbr.rel (0) target = $region9
    $region8: #{transformer_layer_forward.1} parent=1 // pred_region
      _
    $region9: #{transformer_layer_forward.1} parent=1 // pred_fallthru
      _
    // Predicated region
    $region10: #{transformer_layer_forward.1} parent=1 // pred_check
      _
    $region11: #{transformer_layer_forward.1} parent=1 // pred_check_branch
      %29 = sbr.rel (0) target = $region13
    $region12: #{transformer_layer_forward.1} parent=1 // pred_region
      _
    $region13: #{transformer_layer_forward.1} parent=1 // pred_fallthru
      _
    // Predicated region
    $region14: #{transformer_layer_forward.1} parent=1 // pred_check
      _
    $region15: #{transformer_layer_forward.1} parent=1 // pred_check_branch
      %31 = sbr.rel (0) target = $region17
    $region16: #{transformer_layer_forward.1} parent=1 // pred_region
      _
    $region17: #{transformer_layer_forward.1} parent=1 // pred_fallthru
      _
    // Predicated region
    $region18: #{transformer_layer_forward.1} parent=1 // pred_check
      _
    $region19: #{transformer_layer_forward.1} parent=1 // pred_check_branch
      %33 = sbr.rel (0) target = $region21
    $region20: #{transformer_layer_forward.1} parent=1 // pred_region
      _
    $region21: #{transformer_layer_forward.1} parent=1 // pred_fallthru
      _
    // Predicated region
    $region22: #{transformer_layer_forward.1} parent=1 // pred_check
      _
    $region23: #{transformer_layer_forward.1} parent=1 // pred_check_branch
      %35 = sbr.rel (0) target = $region25
    $region24: #{transformer_layer_forward.1} parent=1 // pred_region
      _
    $region25: #{transformer_layer_forward.1} parent=1 // pred_fallthru
      _
    // Predicated region
    $region26: #{transformer_layer_forward.1} parent=1 // pred_check
      _
    $region27: #{transformer_layer_forward.1} parent=1 // pred_check_branch
      %37 = sbr.rel (0) target = $region29
    $region28: #{transformer_layer_forward.1} parent=1 // pred_region
      _
    $region29: #{transformer_layer_forward.1} parent=1 // pred_fallthru
      _
    // Predicated region
    $region30: #{transformer_layer_forward.1} parent=1 // pred_check
      _
    $region31: #{transformer_layer_forward.1} parent=1 // pred_check_branch
      %39 = sbr.rel (0) target = $region33
    $region32: #{transformer_layer_forward.1} parent=1 // pred_region
      _
    $region33: #{transformer_layer_forward.1} parent=1 // pred_fallthru
      _
    // Predicated region
    $region34: #{transformer_layer_forward.1} parent=1 // pred_check
      _
    $region35: #{transformer_layer_forward.1} parent=1 // pred_check_branch
      %41 = sbr.rel (0) target = $region37
    $region36: #{transformer_layer_forward.1} parent=1 // pred_region
      _
    $region37: #{transformer_layer_forward.1} parent=1 // pred_fallthru
      _
    // Predicated region
    $region38: #{transformer_layer_forward.1} parent=1 // pred_check
      _
    $region39: #{transformer_layer_forward.1} parent=1 // pred_check_branch
      %43 = sbr.rel (0) target = $region41
    $region40: #{transformer_layer_forward.1} parent=1 // pred_region
      _
    $region41: #{transformer_layer_forward.1} parent=1 // pred_fallthru
      _
    // Predicated region
    $region42: #{transformer_layer_forward.1} parent=1 // pred_check
      _
    $region43: #{transformer_layer_forward.1} parent=1 // pred_check_branch
      %45 = sbr.rel (0) target = $region45
    $region44: #{transformer_layer_forward.1} parent=1 // pred_region
      _
    $region45: #{transformer_layer_forward.1} parent=1 // pred_fallthru
      _
    // Predicated region
    $region46: #{transformer_layer_forward.1} parent=1 // pred_check
      _
    $region47: #{transformer_layer_forward.1} parent=1 // pred_check_branch
      %47 = sbr.rel (0) target = $region49
    $region48: #{transformer_layer_forward.1} parent=1 // pred_region
      _
    $region49: #{transformer_layer_forward.1} parent=1 // pred_fallthru
      _
    // Predicated region
    $region50: #{transformer_layer_forward.1} parent=1 // pred_check
      _
    $region51: #{transformer_layer_forward.1} parent=1 // pred_check_branch
      %49 = sbr.rel (0) target = $region53
    $region52: #{transformer_layer_forward.1} parent=1 // pred_region
      _
    $region53: #{transformer_layer_forward.1} parent=1 // pred_fallthru
      _
    // Predicated region
    $region54: #{transformer_layer_forward.1} parent=1 // pred_check
      _
    $region55: #{transformer_layer_forward.1} parent=1 // pred_check_branch
      %51 = sbr.rel (0) target = $region57
    $region56: #{transformer_layer_forward.1} parent=1 // pred_region
      _
    $region57: #{transformer_layer_forward.1} parent=1 // pred_fallthru
      _
    // Predicated region
    $region58: #{transformer_layer_forward.1} parent=1 // pred_check
      _
    $region59: #{transformer_layer_forward.1} parent=1 // pred_check_branch
      %53 = sbr.rel (0) target = $region61
    $region60: #{transformer_layer_forward.1} parent=1 // pred_region
      _
    $region61: #{transformer_layer_forward.1} parent=1 // pred_fallthru
      _
    // Predicated region
    $region62: #{transformer_layer_forward.1} parent=1 // pred_check
      _
    $region63: #{transformer_layer_forward.1} parent=1 // pred_check_branch
      %55 = sbr.rel (0) target = $region65
    $region64: #{transformer_layer_forward.1} parent=1 // pred_region
      _
    $region65: #{transformer_layer_forward.1} parent=1 // pred_fallthru
      _
    // Predicated region
    $region66: #{transformer_layer_forward.1} parent=1 // pred_check
      _
    $region67: #{transformer_layer_forward.1} parent=1 // pred_check_branch
      %57 = sbr.rel (0) target = $region69
    $region68: #{transformer_layer_forward.1} parent=1 // pred_region
      _
    $region69: #{transformer_layer_forward.1} parent=1 // pred_fallthru
      _
    // Predicated region
    $region70: #{transformer_layer_forward.1} parent=1 // pred_check
      _
    $region71: #{transformer_layer_forward.1} parent=1 // pred_check_branch
      %59 = sbr.rel (0) target = $region73
    $region72: #{transformer_layer_forward.1} parent=1 // pred_region
      _
    $region73: #{transformer_layer_forward.1} parent=1 // pred_fallthru
      _
    %s60 = smul.u32 0, 8
    %v61 = vld [vmem:[%s0] sm:$0xff]
    %s62 = scalar_lea.vmem %s0, %s60
    %v63 = vld [vmem:[%s62] sm:$0xff]
    %v64 = vld [vmem:[%s1] sm:$0xff]
    %v65 = vld [vmem:[%s2] sm:$0xff]
    %v66 = vld [vmem:[%s2 + $0x8] sm:$0xff]
    %v67 = vld [vmem:[%s2 + $0x10] sm:$0xff]
    %v68 = vld [vmem:[%s2 + $0x18] sm:$0xff]
    %v69 = vld [vmem:[%s2 + $0x20] sm:$0xff]
    %v70 = vld [vmem:[%s2 + $0x28] sm:$0xff]
    %v71 = vld [vmem:[%s2 + $0x30] sm:$0xff]
    %v72 = vld [vmem:[%s2 + $0x38] sm:$0xff]
    %v73 = vld [vmem:[%s2 + $0x40] sm:$0xff]
    %v74 = vld [vmem:[%s2 + $0x48] sm:$0xff]
    %v75 = vld [vmem:[%s2 + $0x50] sm:$0xff]
    %v76 = vld [vmem:[%s2 + $0x58] sm:$0xff]
    %v77 = vld [vmem:[%s2 + $0x60] sm:$0xff]
    %v78 = vld [vmem:[%s2 + $0x68] sm:$0xff]
    %v79 = vld [vmem:[%s2 + $0x70] sm:$0xff]
    %v80 = vld [vmem:[%s2 + $0x78] sm:$0xff]
    %v81 = vld [vmem:[%s3] sm:$0x1]
    %v82 = vld [vmem:[%s3 + $0x1] sm:$0x1]
    %v83 = vld [vmem:[%s3 + $0x2] sm:$0x1]
    %v84 = vld [vmem:[%s3 + $0x3] sm:$0x1]
    %v89 = vlaneseq
    %v90 = vshrl.u32 %v89, 7
    %v91 = vsub.s32 0, %v90
    %v92 = vrot.slane %v81, %v91
    %v93 = vlaneseq
    %v94 = vshrl.u32 %v93, 7
    %v95 = vsub.s32 0, %v94
    %v96 = vrot.slane %v82, %v95
    %v97 = vlaneseq
    %v98 = vshrl.u32 %v97, 7
    %v99 = vsub.s32 0, %v98
    %v100 = vrot.slane %v83, %v99
    %v101 = vlaneseq
    %v102 = vshrl.u32 %v101, 7
    %v103 = vsub.s32 0, %v102
    %v104 = vrot.slane %v84, %v103
    %vm109 = vcmask 261120
    %v111 = vsel %vm109, %v63, 0
    %113 = vmatprep.subr.mxu0 0.0
    %114 = vmatpush1.msra.mxu0 0.0
    %115 = vmatprep.subr.mxu0 0.0
    %116 = vmatpush1.msra.mxu0 0.0
    %117 = vmatprep.subr.mxu0 0.0
    %118 = vmatpush1.msra.mxu0 0.0
    %119 = vmatprep.subr.mxu0 0.0
    %120 = vmatpush1.msra.mxu0 0.0
    %121 = vmatprep.subr.mxu0 0.0
    %122 = vmatpush1.msra.mxu0 0.0
    %123 = vmatprep.subr.mxu0 0.0
    %124 = vmatpush1.msra.mxu0 0.0
    %125 = vmatprep.subr.mxu0 0.0
    %126 = vmatpush1.msra.mxu0 0.0
    %127 = vmatprep.subr.mxu0 0.0
    %128 = vmatpush1.msra.mxu0 0.0
    %129 = vmatprep.subr.mxu0 0.0
    %130 = vmatpush1.msra.mxu0 0.0
    %131 = vmatprep.subr.mxu0 0.0
    %132 = vmatpush1.msra.mxu0 0.0
    %133 = vmatprep.subr.mxu0 0.0
    %134 = vmatpush1.msra.mxu0 0.0
    %135 = vmatprep.subr.mxu0 0.0
    %136 = vmatpush1.msra.mxu0 0.0
    %137 = vmatprep.subr.mxu0 0.0
    %138 = vmatpush1.msra.mxu0 %v68
    %139 = vmatprep.subr.mxu0 0.0
    %140 = vmatpush1.msra.mxu0 %v67
    %141 = vmatprep.subr.mxu0 0.0
    %142 = vmatpush1.msra.mxu0 %v66
    %143 = vmatprep.subr.mxu0 0.0
    %144 = vmatpush1.msra.mxu0 %v65
    %145 = vmatprep.subr.mxu0 0.0
    %146 = vmatpush2.msra.mxu0 0.0
    %147 = vmatprep.subr.mxu0 0.0
    %148 = vmatpush2.msra.mxu0 0.0
    %149 = vmatprep.subr.mxu0 0.0
    %150 = vmatpush2.msra.mxu0 0.0
    %151 = vmatprep.subr.mxu0 0.0
    %152 = vmatpush2.msra.mxu0 0.0
    %153 = vmatprep.subr.mxu0 0.0
    %154 = vmatpush2.msra.mxu0 0.0
    %155 = vmatprep.subr.mxu0 0.0
    %156 = vmatpush2.msra.mxu0 0.0
    %157 = vmatprep.subr.mxu0 0.0
    %158 = vmatpush2.msra.mxu0 0.0
    %159 = vmatprep.subr.mxu0 0.0
    %160 = vmatpush2.msra.mxu0 0.0
    %161 = vmatprep.subr.mxu0 0.0
    %162 = vmatpush2.msra.mxu0 0.0
    %163 = vmatprep.subr.mxu0 0.0
    %164 = vmatpush2.msra.mxu0 0.0
    %165 = vmatprep.subr.mxu0 0.0
    %166 = vmatpush2.msra.mxu0 0.0
    %167 = vmatprep.subr.mxu0 0.0
    %168 = vmatpush2.msra.mxu0 0.0
    %169 = vmatprep.subr.mxu0 0.0
    %170 = vmatpush2.msra.mxu0 0.0
    %171 = vmatprep.subr.mxu0 0.0
    %172 = vmatpush2.msra.mxu0 0.0
    %173 = vmatprep.subr.mxu0 0.0
    %174 = vmatpush2.msra.mxu0 0.0
    %175 = vmatprep.subr.mxu0 0.0
    %176 = vmatpush2.msra.mxu0 0.0
    %177 = vmatprep.mubr.f32.mxu0 0.0
    %178 = vmatmul.mubr.f32.gmra.mxu0 %v111
    %v179 = vpop.f32.mrf.mxu0
    %v180 = vadd.f32 %v92, %v179
    %v181 = vpop.f32.mrf.mxu0
    %182 = vdwg.mxu0
    %183 = vmatprep.subr.mxu0 0.0
    %184 = vmatpush1.msra.mxu0 0.0
    %185 = vmatprep.subr.mxu0 0.0
    %186 = vmatpush1.msra.mxu0 0.0
    %187 = vmatprep.subr.mxu0 0.0
    %188 = vmatpush1.msra.mxu0 0.0
    %189 = vmatprep.subr.mxu0 0.0
    %190 = vmatpush1.msra.mxu0 0.0
    %191 = vmatprep.subr.mxu0 0.0
    %192 = vmatpush1.msra.mxu0 0.0
    %193 = vmatprep.subr.mxu0 0.0
    %194 = vmatpush1.msra.mxu0 0.0
    %195 = vmatprep.subr.mxu0 0.0
    %196 = vmatpush1.msra.mxu0 0.0
    %197 = vmatprep.subr.mxu0 0.0
    %198 = vmatpush1.msra.mxu0 0.0
    %199 = vmatprep.subr.mxu0 0.0
    %200 = vmatpush1.msra.mxu0 0.0
    %201 = vmatprep.subr.mxu0 0.0
    %202 = vmatpush1.msra.mxu0 0.0
    %203 = vmatprep.subr.mxu0 0.0
    %204 = vmatpush1.msra.mxu0 0.0
    %205 = vmatprep.subr.mxu0 0.0
    %206 = vmatpush1.msra.mxu0 0.0
    %207 = vmatprep.subr.mxu0 0.0
    %208 = vmatpush1.msra.mxu0 %v72
    %209 = vmatprep.subr.mxu0 0.0
    %210 = vmatpush1.msra.mxu0 %v71
    %211 = vmatprep.subr.mxu0 0.0
    %212 = vmatpush1.msra.mxu0 %v70
    %213 = vmatprep.subr.mxu0 0.0
    %214 = vmatpush1.msra.mxu0 %v69
    %215 = vmatprep.subr.mxu0 0.0
    %216 = vmatpush2.msra.mxu0 0.0
    %217 = vmatprep.subr.mxu0 0.0
    %218 = vmatpush2.msra.mxu0 0.0
    %219 = vmatprep.subr.mxu0 0.0
    %220 = vmatpush2.msra.mxu0 0.0
    %221 = vmatprep.subr.mxu0 0.0
    %222 = vmatpush2.msra.mxu0 0.0
    %223 = vmatprep.subr.mxu0 0.0
    %224 = vmatpush2.msra.mxu0 0.0
    %225 = vmatprep.subr.mxu0 0.0
    %226 = vmatpush2.msra.mxu0 0.0
    %227 = vmatprep.subr.mxu0 0.0
    %228 = vmatpush2.msra.mxu0 0.0
    %229 = vmatprep.subr.mxu0 0.0
    %230 = vmatpush2.msra.mxu0 0.0
    %231 = vmatprep.subr.mxu0 0.0
    %232 = vmatpush2.msra.mxu0 0.0
    %233 = vmatprep.subr.mxu0 0.0
    %234 = vmatpush2.msra.mxu0 0.0
    %235 = vmatprep.subr.mxu0 0.0
    %236 = vmatpush2.msra.mxu0 0.0
    %237 = vmatprep.subr.mxu0 0.0
    %238 = vmatpush2.msra.mxu0 0.0
    %239 = vmatprep.subr.mxu0 0.0
    %240 = vmatpush2.msra.mxu0 0.0
    %241 = vmatprep.subr.mxu0 0.0
    %242 = vmatpush2.msra.mxu0 0.0
    %243 = vmatprep.subr.mxu0 0.0
    %244 = vmatpush2.msra.mxu0 0.0
    %245 = vmatprep.subr.mxu0 0.0
    %246 = vmatpush2.msra.mxu0 0.0
    %247 = vmatprep.mubr.f32.mxu0 0.0
    %248 = vmatmul.mubr.f32.gmra.mxu0 %v111
    %v249 = vpop.f32.mrf.mxu0
    %v250 = vadd.f32 %v96, %v249
    %v251 = vpop.f32.mrf.mxu0
    %252 = vdwg.mxu0
    %253 = vmatprep.subr.mxu0 0.0
    %254 = vmatpush1.msra.mxu0 0.0
    %255 = vmatprep.subr.mxu0 0.0
    %256 = vmatpush1.msra.mxu0 0.0
    %257 = vmatprep.subr.mxu0 0.0
    %258 = vmatpush1.msra.mxu0 0.0
    %259 = vmatprep.subr.mxu0 0.0
    %260 = vmatpush1.msra.mxu0 0.0
    %261 = vmatprep.subr.mxu0 0.0
    %262 = vmatpush1.msra.mxu0 0.0
    %263 = vmatprep.subr.mxu0 0.0
    %264 = vmatpush1.msra.mxu0 0.0
    %265 = vmatprep.subr.mxu0 0.0
    %266 = vmatpush1.msra.mxu0 0.0
    %267 = vmatprep.subr.mxu0 0.0
    %268 = vmatpush1.msra.mxu0 0.0
    %269 = vmatprep.subr.mxu0 0.0
    %270 = vmatpush1.msra.mxu0 0.0
    %271 = vmatprep.subr.mxu0 0.0
    %272 = vmatpush1.msra.mxu0 0.0
    %273 = vmatprep.subr.mxu0 0.0
    %274 = vmatpush1.msra.mxu0 0.0
    %275 = vmatprep.subr.mxu0 0.0
    %276 = vmatpush1.msra.mxu0 0.0
    %277 = vmatprep.subr.mxu0 0.0
    %278 = vmatpush1.msra.mxu0 %v76
    %279 = vmatprep.subr.mxu0 0.0
    %280 = vmatpush1.msra.mxu0 %v75
    %281 = vmatprep.subr.mxu0 0.0
    %282 = vmatpush1.msra.mxu0 %v74
    %283 = vmatprep.subr.mxu0 0.0
    %284 = vmatpush1.msra.mxu0 %v73
    %285 = vmatprep.subr.mxu0 0.0
    %286 = vmatpush2.msra.mxu0 0.0
    %287 = vmatprep.subr.mxu0 0.0
    %288 = vmatpush2.msra.mxu0 0.0
    %289 = vmatprep.subr.mxu0 0.0
    %290 = vmatpush2.msra.mxu0 0.0
    %291 = vmatprep.subr.mxu0 0.0
    %292 = vmatpush2.msra.mxu0 0.0
    %293 = vmatprep.subr.mxu0 0.0
    %294 = vmatpush2.msra.mxu0 0.0
    %295 = vmatprep.subr.mxu0 0.0
    %296 = vmatpush2.msra.mxu0 0.0
    %297 = vmatprep.subr.mxu0 0.0
    %298 = vmatpush2.msra.mxu0 0.0
    %299 = vmatprep.subr.mxu0 0.0
    %300 = vmatpush2.msra.mxu0 0.0
    %301 = vmatprep.subr.mxu0 0.0
    %302 = vmatpush2.msra.mxu0 0.0
    %303 = vmatprep.subr.mxu0 0.0
    %304 = vmatpush2.msra.mxu0 0.0
    %305 = vmatprep.subr.mxu0 0.0
    %306 = vmatpush2.msra.mxu0 0.0
    %307 = vmatprep.subr.mxu0 0.0
    %308 = vmatpush2.msra.mxu0 0.0
    %309 = vmatprep.subr.mxu0 0.0
    %310 = vmatpush2.msra.mxu0 0.0
    %311 = vmatprep.subr.mxu0 0.0
    %312 = vmatpush2.msra.mxu0 0.0
    %313 = vmatprep.subr.mxu0 0.0
    %314 = vmatpush2.msra.mxu0 0.0
    %315 = vmatprep.subr.mxu0 0.0
    %316 = vmatpush2.msra.mxu0 0.0
    %317 = vmatprep.mubr.f32.mxu0 0.0
    %318 = vmatmul.mubr.f32.gmra.mxu0 %v111
    %v319 = vpop.f32.mrf.mxu0
    %v320 = vadd.f32 %v100, %v319
    %v321 = vpop.f32.mrf.mxu0
    %322 = vdwg.mxu0
    %323 = vmatprep.subr.mxu0 0.0
    %324 = vmatpush1.msra.mxu0 0.0
    %325 = vmatprep.subr.mxu0 0.0
    %326 = vmatpush1.msra.mxu0 0.0
    %327 = vmatprep.subr.mxu0 0.0
    %328 = vmatpush1.msra.mxu0 0.0
    %329 = vmatprep.subr.mxu0 0.0
    %330 = vmatpush1.msra.mxu0 0.0
    %331 = vmatprep.subr.mxu0 0.0
    %332 = vmatpush1.msra.mxu0 0.0
    %333 = vmatprep.subr.mxu0 0.0
    %334 = vmatpush1.msra.mxu0 0.0
    %335 = vmatprep.subr.mxu0 0.0
    %336 = vmatpush1.msra.mxu0 0.0
    %337 = vmatprep.subr.mxu0 0.0
    %338 = vmatpush1.msra.mxu0 0.0
    %339 = vmatprep.subr.mxu0 0.0
    %340 = vmatpush1.msra.mxu0 0.0
    %341 = vmatprep.subr.mxu0 0.0
    %342 = vmatpush1.msra.mxu0 0.0
    %343 = vmatprep.subr.mxu0 0.0
    %344 = vmatpush1.msra.mxu0 0.0
    %345 = vmatprep.subr.mxu0 0.0
    %346 = vmatpush1.msra.mxu0 0.0
    %347 = vmatprep.subr.mxu0 0.0
    %348 = vmatpush1.msra.mxu0 %v80
    %349 = vmatprep.subr.mxu0 0.0
    %350 = vmatpush1.msra.mxu0 %v79
    %351 = vmatprep.subr.mxu0 0.0
    %352 = vmatpush1.msra.mxu0 %v78
    %353 = vmatprep.subr.mxu0 0.0
    %354 = vmatpush1.msra.mxu0 %v77
    %355 = vmatprep.subr.mxu0 0.0
    %356 = vmatpush2.msra.mxu0 0.0
    %357 = vmatprep.subr.mxu0 0.0
    %358 = vmatpush2.msra.mxu0 0.0
    %359 = vmatprep.subr.mxu0 0.0
    %360 = vmatpush2.msra.mxu0 0.0
    %361 = vmatprep.subr.mxu0 0.0
    %362 = vmatpush2.msra.mxu0 0.0
    %363 = vmatprep.subr.mxu0 0.0
    %364 = vmatpush2.msra.mxu0 0.0
    %365 = vmatprep.subr.mxu0 0.0
    %366 = vmatpush2.msra.mxu0 0.0
    %367 = vmatprep.subr.mxu0 0.0
    %368 = vmatpush2.msra.mxu0 0.0
    %369 = vmatprep.subr.mxu0 0.0
    %370 = vmatpush2.msra.mxu0 0.0
    %371 = vmatprep.subr.mxu0 0.0
    %372 = vmatpush2.msra.mxu0 0.0
    %373 = vmatprep.subr.mxu0 0.0
    %374 = vmatpush2.msra.mxu0 0.0
    %375 = vmatprep.subr.mxu0 0.0
    %376 = vmatpush2.msra.mxu0 0.0
    %377 = vmatprep.subr.mxu0 0.0
    %378 = vmatpush2.msra.mxu0 0.0
    %379 = vmatprep.subr.mxu0 0.0
    %380 = vmatpush2.msra.mxu0 0.0
    %381 = vmatprep.subr.mxu0 0.0
    %382 = vmatpush2.msra.mxu0 0.0
    %383 = vmatprep.subr.mxu0 0.0
    %384 = vmatpush2.msra.mxu0 0.0
    %385 = vmatprep.subr.mxu0 0.0
    %386 = vmatpush2.msra.mxu0 0.0
    %387 = vmatprep.mubr.f32.mxu0 0.0
    %388 = vmatmul.mubr.f32.gmra.mxu0 %v111
    %v389 = vpop.f32.mrf.mxu0
    %v390 = vadd.f32 %v104, %v389
    %v391 = vpop.f32.mrf.mxu0
    %392 = vdwg.mxu0
    %v393 = vld [vmem:[%s4] sm:$0xff]
    %v394 = vld [vmem:[%s4 + $0x8] sm:$0xff]
    %v395 = vld [vmem:[%s4 + $0x10] sm:$0xff]
    %v396 = vld [vmem:[%s4 + $0x18] sm:$0xff]
    %v397 = vld [vmem:[%s4 + $0x20] sm:$0xff]
    %v398 = vld [vmem:[%s4 + $0x28] sm:$0xff]
    %v399 = vld [vmem:[%s4 + $0x30] sm:$0xff]
    %v400 = vld [vmem:[%s4 + $0x38] sm:$0xff]
    %v401 = vld [vmem:[%s4 + $0x40] sm:$0xff]
    %v402 = vld [vmem:[%s4 + $0x48] sm:$0xff]
    %v403 = vld [vmem:[%s4 + $0x50] sm:$0xff]
    %v404 = vld [vmem:[%s4 + $0x58] sm:$0xff]
    %v405 = vld [vmem:[%s4 + $0x60] sm:$0xff]
    %v406 = vld [vmem:[%s4 + $0x68] sm:$0xff]
    %v407 = vld [vmem:[%s4 + $0x70] sm:$0xff]
    %v408 = vld [vmem:[%s4 + $0x78] sm:$0xff]
    %v409 = vld [vmem:[%s5] sm:$0x1]
    %v410 = vld [vmem:[%s5 + $0x1] sm:$0x1]
    %v411 = vld [vmem:[%s5 + $0x2] sm:$0x1]
    %v412 = vld [vmem:[%s5 + $0x3] sm:$0x1]
    %v417 = vlaneseq
    %v418 = vshrl.u32 %v417, 7
    %v419 = vsub.s32 0, %v418
    %v420 = vrot.slane %v409, %v419
    %v421 = vlaneseq
    %v422 = vshrl.u32 %v421, 7
    %v423 = vsub.s32 0, %v422
    %v424 = vrot.slane %v410, %v423
    %v425 = vlaneseq
    %v426 = vshrl.u32 %v425, 7
    %v427 = vsub.s32 0, %v426
    %v428 = vrot.slane %v411, %v427
    %v429 = vlaneseq
    %v430 = vshrl.u32 %v429, 7
    %v431 = vsub.s32 0, %v430
    %v432 = vrot.slane %v412, %v431
    %v438 = vsel %vm109, %v61, 0
    %440 = vmatprep.subr.mxu0 0.0
    %441 = vmatpush1.msra.mxu0 0.0
    %442 = vmatprep.subr.mxu0 0.0
    %443 = vmatpush1.msra.mxu0 0.0
    %444 = vmatprep.subr.mxu0 0.0
    %445 = vmatpush1.msra.mxu0 0.0
    %446 = vmatprep.subr.mxu0 0.0
    %447 = vmatpush1.msra.mxu0 0.0
    %448 = vmatprep.subr.mxu0 0.0
    %449 = vmatpush1.msra.mxu0 0.0
    %450 = vmatprep.subr.mxu0 0.0
    %451 = vmatpush1.msra.mxu0 0.0
    %452 = vmatprep.subr.mxu0 0.0
    %453 = vmatpush1.msra.mxu0 0.0
    %454 = vmatprep.subr.mxu0 0.0
    %455 = vmatpush1.msra.mxu0 0.0
    %456 = vmatprep.subr.mxu0 0.0
    %457 = vmatpush1.msra.mxu0 0.0
    %458 = vmatprep.subr.mxu0 0.0
    %459 = vmatpush1.msra.mxu0 0.0
    %460 = vmatprep.subr.mxu0 0.0
    %461 = vmatpush1.msra.mxu0 0.0
    %462 = vmatprep.subr.mxu0 0.0
    %463 = vmatpush1.msra.mxu0 0.0
    %464 = vmatprep.subr.mxu0 0.0
    %465 = vmatpush1.msra.mxu0 %v396
    %466 = vmatprep.subr.mxu0 0.0
    %467 = vmatpush1.msra.mxu0 %v395
    %468 = vmatprep.subr.mxu0 0.0
    %469 = vmatpush1.msra.mxu0 %v394
    %470 = vmatprep.subr.mxu0 0.0
    %471 = vmatpush1.msra.mxu0 %v393
    %472 = vmatprep.subr.mxu0 0.0
    %473 = vmatpush2.msra.mxu0 0.0
    %474 = vmatprep.subr.mxu0 0.0
    %475 = vmatpush2.msra.mxu0 0.0
    %476 = vmatprep.subr.mxu0 0.0
    %477 = vmatpush2.msra.mxu0 0.0
    %478 = vmatprep.subr.mxu0 0.0
    %479 = vmatpush2.msra.mxu0 0.0
    %480 = vmatprep.subr.mxu0 0.0
    %481 = vmatpush2.msra.mxu0 0.0
    %482 = vmatprep.subr.mxu0 0.0
    %483 = vmatpush2.msra.mxu0 0.0
    %484 = vmatprep.subr.mxu0 0.0
    %485 = vmatpush2.msra.mxu0 0.0
    %486 = vmatprep.subr.mxu0 0.0
    %487 = vmatpush2.msra.mxu0 0.0
    %488 = vmatprep.subr.mxu0 0.0
    %489 = vmatpush2.msra.mxu0 0.0
    %490 = vmatprep.subr.mxu0 0.0
    %491 = vmatpush2.msra.mxu0 0.0
    %492 = vmatprep.subr.mxu0 0.0
    %493 = vmatpush2.msra.mxu0 0.0
    %494 = vmatprep.subr.mxu0 0.0
    %495 = vmatpush2.msra.mxu0 0.0
    %496 = vmatprep.subr.mxu0 0.0
    %497 = vmatpush2.msra.mxu0 0.0
    %498 = vmatprep.subr.mxu0 0.0
    %499 = vmatpush2.msra.mxu0 0.0
    %500 = vmatprep.subr.mxu0 0.0
    %501 = vmatpush2.msra.mxu0 0.0
    %502 = vmatprep.subr.mxu0 0.0
    %503 = vmatpush2.msra.mxu0 0.0
    %504 = vmatprep.mubr.f32.mxu0 0.0
    %505 = vmatmul.mubr.f32.gmra.mxu0 %v438
    %v506 = vpop.f32.mrf.mxu0
    %v507 = vadd.f32 %v420, %v506
    %v508 = vpop.f32.mrf.mxu0
    %509 = vdwg.mxu0
    %510 = vmatprep.subr.mxu0 0.0
    %511 = vmatpush1.msra.mxu0 0.0
    %512 = vmatprep.subr.mxu0 0.0
    %513 = vmatpush1.msra.mxu0 0.0
    %514 = vmatprep.subr.mxu0 0.0
    %515 = vmatpush1.msra.mxu0 0.0
    %516 = vmatprep.subr.mxu0 0.0
    %517 = vmatpush1.msra.mxu0 0.0
    %518 = vmatprep.subr.mxu0 0.0
    %519 = vmatpush1.msra.mxu0 0.0
    %520 = vmatprep.subr.mxu0 0.0
    %521 = vmatpush1.msra.mxu0 0.0
    %522 = vmatprep.subr.mxu0 0.0
    %523 = vmatpush1.msra.mxu0 0.0
    %524 = vmatprep.subr.mxu0 0.0
    %525 = vmatpush1.msra.mxu0 0.0
    %526 = vmatprep.subr.mxu0 0.0
    %527 = vmatpush1.msra.mxu0 0.0
    %528 = vmatprep.subr.mxu0 0.0
    %529 = vmatpush1.msra.mxu0 0.0
    %530 = vmatprep.subr.mxu0 0.0
    %531 = vmatpush1.msra.mxu0 0.0
    %532 = vmatprep.subr.mxu0 0.0
    %533 = vmatpush1.msra.mxu0 0.0
    %534 = vmatprep.subr.mxu0 0.0
    %535 = vmatpush1.msra.mxu0 %v400
    %536 = vmatprep.subr.mxu0 0.0
    %537 = vmatpush1.msra.mxu0 %v399
    %538 = vmatprep.subr.mxu0 0.0
    %539 = vmatpush1.msra.mxu0 %v398
    %540 = vmatprep.subr.mxu0 0.0
    %541 = vmatpush1.msra.mxu0 %v397
    %542 = vmatprep.subr.mxu0 0.0
    %543 = vmatpush2.msra.mxu0 0.0
    %544 = vmatprep.subr.mxu0 0.0
    %545 = vmatpush2.msra.mxu0 0.0
    %546 = vmatprep.subr.mxu0 0.0
    %547 = vmatpush2.msra.mxu0 0.0
    %548 = vmatprep.subr.mxu0 0.0
    %549 = vmatpush2.msra.mxu0 0.0
    %550 = vmatprep.subr.mxu0 0.0
    %551 = vmatpush2.msra.mxu0 0.0
    %552 = vmatprep.subr.mxu0 0.0
    %553 = vmatpush2.msra.mxu0 0.0
    %554 = vmatprep.subr.mxu0 0.0
    %555 = vmatpush2.msra.mxu0 0.0
    %556 = vmatprep.subr.mxu0 0.0
    %557 = vmatpush2.msra.mxu0 0.0
    %558 = vmatprep.subr.mxu0 0.0
    %559 = vmatpush2.msra.mxu0 0.0
    %560 = vmatprep.subr.mxu0 0.0
    %561 = vmatpush2.msra.mxu0 0.0
    %562 = vmatprep.subr.mxu0 0.0
    %563 = vmatpush2.msra.mxu0 0.0
    %564 = vmatprep.subr.mxu0 0.0
    %565 = vmatpush2.msra.mxu0 0.0
    %566 = vmatprep.subr.mxu0 0.0
    %567 = vmatpush2.msra.mxu0 0.0
    %568 = vmatprep.subr.mxu0 0.0
    %569 = vmatpush2.msra.mxu0 0.0
    %570 = vmatprep.subr.mxu0 0.0
    %571 = vmatpush2.msra.mxu0 0.0
    %572 = vmatprep.subr.mxu0 0.0
    %573 = vmatpush2.msra.mxu0 0.0
    %574 = vmatprep.mubr.f32.mxu0 0.0
    %575 = vmatmul.mubr.f32.gmra.mxu0 %v438
    %v576 = vpop.f32.mrf.mxu0
    %v577 = vadd.f32 %v424, %v576
    %v578 = vpop.f32.mrf.mxu0
    %579 = vdwg.mxu0
    %580 = vmatprep.subr.mxu0 0.0
    %581 = vmatpush1.msra.mxu0 0.0
    %582 = vmatprep.subr.mxu0 0.0
    %583 = vmatpush1.msra.mxu0 0.0
    %584 = vmatprep.subr.mxu0 0.0
    %585 = vmatpush1.msra.mxu0 0.0
    %586 = vmatprep.subr.mxu0 0.0
    %587 = vmatpush1.msra.mxu0 0.0
    %588 = vmatprep.subr.mxu0 0.0
    %589 = vmatpush1.msra.mxu0 0.0
    %590 = vmatprep.subr.mxu0 0.0
    %591 = vmatpush1.msra.mxu0 0.0
    %592 = vmatprep.subr.mxu0 0.0
    %593 = vmatpush1.msra.mxu0 0.0
    %594 = vmatprep.subr.mxu0 0.0
    %595 = vmatpush1.msra.mxu0 0.0
    %596 = vmatprep.subr.mxu0 0.0
    %597 = vmatpush1.msra.mxu0 0.0
    %598 = vmatprep.subr.mxu0 0.0
    %599 = vmatpush1.msra.mxu0 0.0
    %600 = vmatprep.subr.mxu0 0.0
    %601 = vmatpush1.msra.mxu0 0.0
    %602 = vmatprep.subr.mxu0 0.0
    %603 = vmatpush1.msra.mxu0 0.0
    %604 = vmatprep.subr.mxu0 0.0
    %605 = vmatpush1.msra.mxu0 %v404
    %606 = vmatprep.subr.mxu0 0.0
    %607 = vmatpush1.msra.mxu0 %v403
    %608 = vmatprep.subr.mxu0 0.0
    %609 = vmatpush1.msra.mxu0 %v402
    %610 = vmatprep.subr.mxu0 0.0
    %611 = vmatpush1.msra.mxu0 %v401
    %612 = vmatprep.subr.mxu0 0.0
    %613 = vmatpush2.msra.mxu0 0.0
    %614 = vmatprep.subr.mxu0 0.0
    %615 = vmatpush2.msra.mxu0 0.0
    %616 = vmatprep.subr.mxu0 0.0
    %617 = vmatpush2.msra.mxu0 0.0
    %618 = vmatprep.subr.mxu0 0.0
    %619 = vmatpush2.msra.mxu0 0.0
    %620 = vmatprep.subr.mxu0 0.0
    %621 = vmatpush2.msra.mxu0 0.0
    %622 = vmatprep.subr.mxu0 0.0
    %623 = vmatpush2.msra.mxu0 0.0
    %624 = vmatprep.subr.mxu0 0.0
    %625 = vmatpush2.msra.mxu0 0.0
    %626 = vmatprep.subr.mxu0 0.0
    %627 = vmatpush2.msra.mxu0 0.0
    %628 = vmatprep.subr.mxu0 0.0
    %629 = vmatpush2.msra.mxu0 0.0
    %630 = vmatprep.subr.mxu0 0.0
    %631 = vmatpush2.msra.mxu0 0.0
    %632 = vmatprep.subr.mxu0 0.0
    %633 = vmatpush2.msra.mxu0 0.0
    %634 = vmatprep.subr.mxu0 0.0
    %635 = vmatpush2.msra.mxu0 0.0
    %636 = vmatprep.subr.mxu0 0.0
    %637 = vmatpush2.msra.mxu0 0.0
    %638 = vmatprep.subr.mxu0 0.0
    %639 = vmatpush2.msra.mxu0 0.0
    %640 = vmatprep.subr.mxu0 0.0
    %641 = vmatpush2.msra.mxu0 0.0
    %642 = vmatprep.subr.mxu0 0.0
    %643 = vmatpush2.msra.mxu0 0.0
    %644 = vmatprep.mubr.f32.mxu0 0.0
    %645 = vmatmul.mubr.f32.gmra.mxu0 %v438
    %v646 = vpop.f32.mrf.mxu0
    %v647 = vadd.f32 %v428, %v646
    %v648 = vpop.f32.mrf.mxu0
    %649 = vdwg.mxu0
    %650 = vmatprep.subr.mxu0 0.0
    %651 = vmatpush1.msra.mxu0 0.0
    %652 = vmatprep.subr.mxu0 0.0
    %653 = vmatpush1.msra.mxu0 0.0
    %654 = vmatprep.subr.mxu0 0.0
    %655 = vmatpush1.msra.mxu0 0.0
    %656 = vmatprep.subr.mxu0 0.0
    %657 = vmatpush1.msra.mxu0 0.0
    %658 = vmatprep.subr.mxu0 0.0
    %659 = vmatpush1.msra.mxu0 0.0
    %660 = vmatprep.subr.mxu0 0.0
    %661 = vmatpush1.msra.mxu0 0.0
    %662 = vmatprep.subr.mxu0 0.0
    %663 = vmatpush1.msra.mxu0 0.0
    %664 = vmatprep.subr.mxu0 0.0
    %665 = vmatpush1.msra.mxu0 0.0
    %666 = vmatprep.subr.mxu0 0.0
    %667 = vmatpush1.msra.mxu0 0.0
    %668 = vmatprep.subr.mxu0 0.0
    %669 = vmatpush1.msra.mxu0 0.0
    %670 = vmatprep.subr.mxu0 0.0
    %671 = vmatpush1.msra.mxu0 0.0
    %672 = vmatprep.subr.mxu0 0.0
    %673 = vmatpush1.msra.mxu0 0.0
    %674 = vmatprep.subr.mxu0 0.0
    %675 = vmatpush1.msra.mxu0 %v408
    %676 = vmatprep.subr.mxu0 0.0
    %677 = vmatpush1.msra.mxu0 %v407
    %678 = vmatprep.subr.mxu0 0.0
    %679 = vmatpush1.msra.mxu0 %v406
    %680 = vmatprep.subr.mxu0 0.0
    %681 = vmatpush1.msra.mxu0 %v405
    %682 = vmatprep.subr.mxu0 0.0
    %683 = vmatpush2.msra.mxu0 0.0
    %684 = vmatprep.subr.mxu0 0.0
    %685 = vmatpush2.msra.mxu0 0.0
    %686 = vmatprep.subr.mxu0 0.0
    %687 = vmatpush2.msra.mxu0 0.0
    %688 = vmatprep.subr.mxu0 0.0
    %689 = vmatpush2.msra.mxu0 0.0
    %690 = vmatprep.subr.mxu0 0.0
    %691 = vmatpush2.msra.mxu0 0.0
    %692 = vmatprep.subr.mxu0 0.0
    %693 = vmatpush2.msra.mxu0 0.0
    %694 = vmatprep.subr.mxu0 0.0
    %695 = vmatpush2.msra.mxu0 0.0
    %696 = vmatprep.subr.mxu0 0.0
    %697 = vmatpush2.msra.mxu0 0.0
    %698 = vmatprep.subr.mxu0 0.0
    %699 = vmatpush2.msra.mxu0 0.0
    %700 = vmatprep.subr.mxu0 0.0
    %701 = vmatpush2.msra.mxu0 0.0
    %702 = vmatprep.subr.mxu0 0.0
    %703 = vmatpush2.msra.mxu0 0.0
    %704 = vmatprep.subr.mxu0 0.0
    %705 = vmatpush2.msra.mxu0 0.0
    %706 = vmatprep.subr.mxu0 0.0
    %707 = vmatpush2.msra.mxu0 0.0
    %708 = vmatprep.subr.mxu0 0.0
    %709 = vmatpush2.msra.mxu0 0.0
    %710 = vmatprep.subr.mxu0 0.0
    %711 = vmatpush2.msra.mxu0 0.0
    %712 = vmatprep.subr.mxu0 0.0
    %713 = vmatpush2.msra.mxu0 0.0
    %714 = vmatprep.mubr.f32.mxu0 0.0
    %715 = vmatmul.mubr.f32.gmra.mxu0 %v438
    %v716 = vpop.f32.mrf.mxu0
    %v717 = vadd.f32 %v432, %v716
    %v718 = vpop.f32.mrf.mxu0
    %719 = vdwg.mxu0
    %v720 = vld [vmem:[%s6] sm:$0xff]
    %v721 = vld [vmem:[%s6 + $0x8] sm:$0xff]
    %v722 = vld [vmem:[%s6 + $0x10] sm:$0xff]
    %v723 = vld [vmem:[%s6 + $0x18] sm:$0xff]
    %v724 = vld [vmem:[%s6 + $0x20] sm:$0xff]
    %v725 = vld [vmem:[%s6 + $0x28] sm:$0xff]
    %v726 = vld [vmem:[%s6 + $0x30] sm:$0xff]
    %v727 = vld [vmem:[%s6 + $0x38] sm:$0xff]
    %v728 = vld [vmem:[%s6 + $0x40] sm:$0xff]
    %v729 = vld [vmem:[%s6 + $0x48] sm:$0xff]
    %v730 = vld [vmem:[%s6 + $0x50] sm:$0xff]
    %v731 = vld [vmem:[%s6 + $0x58] sm:$0xff]
    %v732 = vld [vmem:[%s6 + $0x60] sm:$0xff]
    %v733 = vld [vmem:[%s6 + $0x68] sm:$0xff]
    %v734 = vld [vmem:[%s6 + $0x70] sm:$0xff]
    %v735 = vld [vmem:[%s6 + $0x78] sm:$0xff]
    %v736 = vld [vmem:[%s7] sm:$0x1]
    %v737 = vld [vmem:[%s7 + $0x1] sm:$0x1]
    %v738 = vld [vmem:[%s7 + $0x2] sm:$0x1]
    %v739 = vld [vmem:[%s7 + $0x3] sm:$0x1]
    %v744 = vlaneseq
    %v745 = vshrl.u32 %v744, 7
    %v746 = vsub.s32 0, %v745
    %v747 = vrot.slane %v736, %v746
    %v748 = vlaneseq
    %v749 = vshrl.u32 %v748, 7
    %v750 = vsub.s32 0, %v749
    %v751 = vrot.slane %v737, %v750
    %v752 = vlaneseq
    %v753 = vshrl.u32 %v752, 7
    %v754 = vsub.s32 0, %v753
    %v755 = vrot.slane %v738, %v754
    %v756 = vlaneseq
    %v757 = vshrl.u32 %v756, 7
    %v758 = vsub.s32 0, %v757
    %v759 = vrot.slane %v739, %v758
    %764 = vmatprep.subr.mxu0 0.0
    %765 = vmatpush1.msra.mxu0 0.0
    %766 = vmatprep.subr.mxu0 0.0
    %767 = vmatpush1.msra.mxu0 0.0
    %768 = vmatprep.subr.mxu0 0.0
    %769 = vmatpush1.msra.mxu0 0.0
    %770 = vmatprep.subr.mxu0 0.0
    %771 = vmatpush1.msra.mxu0 0.0
    %772 = vmatprep.subr.mxu0 0.0
    %773 = vmatpush1.msra.mxu0 0.0
    %774 = vmatprep.subr.mxu0 0.0
    %775 = vmatpush1.msra.mxu0 0.0
    %776 = vmatprep.subr.mxu0 0.0
    %777 = vmatpush1.msra.mxu0 0.0
    %778 = vmatprep.subr.mxu0 0.0
    %779 = vmatpush1.msra.mxu0 0.0
    %780 = vmatprep.subr.mxu0 0.0
    %781 = vmatpush1.msra.mxu0 0.0
    %782 = vmatprep.subr.mxu0 0.0
    %783 = vmatpush1.msra.mxu0 0.0
    %784 = vmatprep.subr.mxu0 0.0
    %785 = vmatpush1.msra.mxu0 0.0
    %786 = vmatprep.subr.mxu0 0.0
    %787 = vmatpush1.msra.mxu0 0.0
    %788 = vmatprep.subr.mxu0 0.0
    %789 = vmatpush1.msra.mxu0 %v723
    %790 = vmatprep.subr.mxu0 0.0
    %791 = vmatpush1.msra.mxu0 %v722
    %792 = vmatprep.subr.mxu0 0.0
    %793 = vmatpush1.msra.mxu0 %v721
    %794 = vmatprep.subr.mxu0 0.0
    %795 = vmatpush1.msra.mxu0 %v720
    %796 = vmatprep.subr.mxu0 0.0
    %797 = vmatpush2.msra.mxu0 0.0
    %798 = vmatprep.subr.mxu0 0.0
    %799 = vmatpush2.msra.mxu0 0.0
    %800 = vmatprep.subr.mxu0 0.0
    %801 = vmatpush2.msra.mxu0 0.0
    %802 = vmatprep.subr.mxu0 0.0
    %803 = vmatpush2.msra.mxu0 0.0
    %804 = vmatprep.subr.mxu0 0.0
    %805 = vmatpush2.msra.mxu0 0.0
    %806 = vmatprep.subr.mxu0 0.0
    %807 = vmatpush2.msra.mxu0 0.0
    %808 = vmatprep.subr.mxu0 0.0
    %809 = vmatpush2.msra.mxu0 0.0
    %810 = vmatprep.subr.mxu0 0.0
    %811 = vmatpush2.msra.mxu0 0.0
    %812 = vmatprep.subr.mxu0 0.0
    %813 = vmatpush2.msra.mxu0 0.0
    %814 = vmatprep.subr.mxu0 0.0
    %815 = vmatpush2.msra.mxu0 0.0
    %816 = vmatprep.subr.mxu0 0.0
    %817 = vmatpush2.msra.mxu0 0.0
    %818 = vmatprep.subr.mxu0 0.0
    %819 = vmatpush2.msra.mxu0 0.0
    %820 = vmatprep.subr.mxu0 0.0
    %821 = vmatpush2.msra.mxu0 0.0
    %822 = vmatprep.subr.mxu0 0.0
    %823 = vmatpush2.msra.mxu0 0.0
    %824 = vmatprep.subr.mxu0 0.0
    %825 = vmatpush2.msra.mxu0 0.0
    %826 = vmatprep.subr.mxu0 0.0
    %827 = vmatpush2.msra.mxu0 0.0
    %828 = vmatprep.mubr.f32.mxu0 0.0
    %829 = vmatmul.mubr.f32.gmra.mxu0 %v438
    %v830 = vpop.f32.mrf.mxu0
    %v831 = vadd.f32 %v747, %v830
    %v832 = vpop.f32.mrf.mxu0
    %833 = vdwg.mxu0
    %834 = vmatprep.subr.mxu0 0.0
    %835 = vmatpush1.msra.mxu0 0.0
    %836 = vmatprep.subr.mxu0 0.0
    %837 = vmatpush1.msra.mxu0 0.0
    %838 = vmatprep.subr.mxu0 0.0
    %839 = vmatpush1.msra.mxu0 0.0
    %840 = vmatprep.subr.mxu0 0.0
    %841 = vmatpush1.msra.mxu0 0.0
    %842 = vmatprep.subr.mxu0 0.0
    %843 = vmatpush1.msra.mxu0 0.0
    %844 = vmatprep.subr.mxu0 0.0
    %845 = vmatpush1.msra.mxu0 0.0
    %846 = vmatprep.subr.mxu0 0.0
    %847 = vmatpush1.msra.mxu0 0.0
    %848 = vmatprep.subr.mxu0 0.0
    %849 = vmatpush1.msra.mxu0 0.0
    %850 = vmatprep.subr.mxu0 0.0
    %851 = vmatpush1.msra.mxu0 0.0
    %852 = vmatprep.subr.mxu0 0.0
    %853 = vmatpush1.msra.mxu0 0.0
    %854 = vmatprep.subr.mxu0 0.0
    %855 = vmatpush1.msra.mxu0 0.0
    %856 = vmatprep.subr.mxu0 0.0
    %857 = vmatpush1.msra.mxu0 0.0
    %858 = vmatprep.subr.mxu0 0.0
    %859 = vmatpush1.msra.mxu0 %v727
    %860 = vmatprep.subr.mxu0 0.0
    %861 = vmatpush1.msra.mxu0 %v726
    %862 = vmatprep.subr.mxu0 0.0
    %863 = vmatpush1.msra.mxu0 %v725
    %864 = vmatprep.subr.mxu0 0.0
    %865 = vmatpush1.msra.mxu0 %v724
    %866 = vmatprep.subr.mxu0 0.0
    %867 = vmatpush2.msra.mxu0 0.0
    %868 = vmatprep.subr.mxu0 0.0
    %869 = vmatpush2.msra.mxu0 0.0
    %870 = vmatprep.subr.mxu0 0.0
    %871 = vmatpush2.msra.mxu0 0.0
    %872 = vmatprep.subr.mxu0 0.0
    %873 = vmatpush2.msra.mxu0 0.0
    %874 = vmatprep.subr.mxu0 0.0
    %875 = vmatpush2.msra.mxu0 0.0
    %876 = vmatprep.subr.mxu0 0.0
    %877 = vmatpush2.msra.mxu0 0.0
    %878 = vmatprep.subr.mxu0 0.0
    %879 = vmatpush2.msra.mxu0 0.0
    %880 = vmatprep.subr.mxu0 0.0
    %881 = vmatpush2.msra.mxu0 0.0
    %882 = vmatprep.subr.mxu0 0.0
    %883 = vmatpush2.msra.mxu0 0.0
    %884 = vmatprep.subr.mxu0 0.0
    %885 = vmatpush2.msra.mxu0 0.0
    %886 = vmatprep.subr.mxu0 0.0
    %887 = vmatpush2.msra.mxu0 0.0
    %888 = vmatprep.subr.mxu0 0.0
    %889 = vmatpush2.msra.mxu0 0.0
    %890 = vmatprep.subr.mxu0 0.0
    %891 = vmatpush2.msra.mxu0 0.0
    %892 = vmatprep.subr.mxu0 0.0
    %893 = vmatpush2.msra.mxu0 0.0
    %894 = vmatprep.subr.mxu0 0.0
    %895 = vmatpush2.msra.mxu0 0.0
    %896 = vmatprep.subr.mxu0 0.0
    %897 = vmatpush2.msra.mxu0 0.0
    %898 = vmatprep.mubr.f32.mxu0 0.0
    %899 = vmatmul.mubr.f32.gmra.mxu0 %v438
    %v900 = vpop.f32.mrf.mxu0
    %v901 = vadd.f32 %v751, %v900
    %v902 = vpop.f32.mrf.mxu0
    %903 = vdwg.mxu0
    %904 = vmatprep.subr.mxu0 0.0
    %905 = vmatpush1.msra.mxu0 0.0
    %906 = vmatprep.subr.mxu0 0.0
    %907 = vmatpush1.msra.mxu0 0.0
    %908 = vmatprep.subr.mxu0 0.0
    %909 = vmatpush1.msra.mxu0 0.0
    %910 = vmatprep.subr.mxu0 0.0
    %911 = vmatpush1.msra.mxu0 0.0
    %912 = vmatprep.subr.mxu0 0.0
    %913 = vmatpush1.msra.mxu0 0.0
    %914 = vmatprep.subr.mxu0 0.0
    %915 = vmatpush1.msra.mxu0 0.0
    %916 = vmatprep.subr.mxu0 0.0
    %917 = vmatpush1.msra.mxu0 0.0
    %918 = vmatprep.subr.mxu0 0.0
    %919 = vmatpush1.msra.mxu0 0.0
    %920 = vmatprep.subr.mxu0 0.0
    %921 = vmatpush1.msra.mxu0 0.0
    %922 = vmatprep.subr.mxu0 0.0
    %923 = vmatpush1.msra.mxu0 0.0
    %924 = vmatprep.subr.mxu0 0.0
    %925 = vmatpush1.msra.mxu0 0.0
    %926 = vmatprep.subr.mxu0 0.0
    %927 = vmatpush1.msra.mxu0 0.0
    %928 = vmatprep.subr.mxu0 0.0
    %929 = vmatpush1.msra.mxu0 %v731
    %930 = vmatprep.subr.mxu0 0.0
    %931 = vmatpush1.msra.mxu0 %v730
    %932 = vmatprep.subr.mxu0 0.0
    %933 = vmatpush1.msra.mxu0 %v729
    %934 = vmatprep.subr.mxu0 0.0
    %935 = vmatpush1.msra.mxu0 %v728
    %936 = vmatprep.subr.mxu0 0.0
    %937 = vmatpush2.msra.mxu0 0.0
    %938 = vmatprep.subr.mxu0 0.0
    %939 = vmatpush2.msra.mxu0 0.0
    %940 = vmatprep.subr.mxu0 0.0
    %941 = vmatpush2.msra.mxu0 0.0
    %942 = vmatprep.subr.mxu0 0.0
    %943 = vmatpush2.msra.mxu0 0.0
    %944 = vmatprep.subr.mxu0 0.0
    %945 = vmatpush2.msra.mxu0 0.0
    %946 = vmatprep.subr.mxu0 0.0
    %947 = vmatpush2.msra.mxu0 0.0
    %948 = vmatprep.subr.mxu0 0.0
    %949 = vmatpush2.msra.mxu0 0.0
    %950 = vmatprep.subr.mxu0 0.0
    %951 = vmatpush2.msra.mxu0 0.0
    %952 = vmatprep.subr.mxu0 0.0
    %953 = vmatpush2.msra.mxu0 0.0
    %954 = vmatprep.subr.mxu0 0.0
    %955 = vmatpush2.msra.mxu0 0.0
    %956 = vmatprep.subr.mxu0 0.0
    %957 = vmatpush2.msra.mxu0 0.0
    %958 = vmatprep.subr.mxu0 0.0
    %959 = vmatpush2.msra.mxu0 0.0
    %960 = vmatprep.subr.mxu0 0.0
    %961 = vmatpush2.msra.mxu0 0.0
    %962 = vmatprep.subr.mxu0 0.0
    %963 = vmatpush2.msra.mxu0 0.0
    %964 = vmatprep.subr.mxu0 0.0
    %965 = vmatpush2.msra.mxu0 0.0
    %966 = vmatprep.subr.mxu0 0.0
    %967 = vmatpush2.msra.mxu0 0.0
    %968 = vmatprep.mubr.f32.mxu0 0.0
    %969 = vmatmul.mubr.f32.gmra.mxu0 %v438
    %v970 = vpop.f32.mrf.mxu0
    %v971 = vadd.f32 %v755, %v970
    %v972 = vpop.f32.mrf.mxu0
    %973 = vdwg.mxu0
    %974 = vmatprep.subr.mxu0 0.0
    %975 = vmatpush1.msra.mxu0 0.0
    %976 = vmatprep.subr.mxu0 0.0
    %977 = vmatpush1.msra.mxu0 0.0
    %978 = vmatprep.subr.mxu0 0.0
    %979 = vmatpush1.msra.mxu0 0.0
    %980 = vmatprep.subr.mxu0 0.0
    %981 = vmatpush1.msra.mxu0 0.0
    %982 = vmatprep.subr.mxu0 0.0
    %983 = vmatpush1.msra.mxu0 0.0
    %984 = vmatprep.subr.mxu0 0.0
    %985 = vmatpush1.msra.mxu0 0.0
    %986 = vmatprep.subr.mxu0 0.0
    %987 = vmatpush1.msra.mxu0 0.0
    %988 = vmatprep.subr.mxu0 0.0
    %989 = vmatpush1.msra.mxu0 0.0
    %990 = vmatprep.subr.mxu0 0.0
    %991 = vmatpush1.msra.mxu0 0.0
    %992 = vmatprep.subr.mxu0 0.0
    %993 = vmatpush1.msra.mxu0 0.0
    %994 = vmatprep.subr.mxu0 0.0
    %995 = vmatpush1.msra.mxu0 0.0
    %996 = vmatprep.subr.mxu0 0.0
    %997 = vmatpush1.msra.mxu0 0.0
    %998 = vmatprep.subr.mxu0 0.0
    %999 = vmatpush1.msra.mxu0 %v735
    %1000 = vmatprep.subr.mxu0 0.0
    %1001 = vmatpush1.msra.mxu0 %v734
    %1002 = vmatprep.subr.mxu0 0.0
    %1003 = vmatpush1.msra.mxu0 %v733
    %1004 = vmatprep.subr.mxu0 0.0
    %1005 = vmatpush1.msra.mxu0 %v732
    %1006 = vmatprep.subr.mxu0 0.0
    %1007 = vmatpush2.msra.mxu0 0.0
    %1008 = vmatprep.subr.mxu0 0.0
    %1009 = vmatpush2.msra.mxu0 0.0
    %1010 = vmatprep.subr.mxu0 0.0
    %1011 = vmatpush2.msra.mxu0 0.0
    %1012 = vmatprep.subr.mxu0 0.0
    %1013 = vmatpush2.msra.mxu0 0.0
    %1014 = vmatprep.subr.mxu0 0.0
    %1015 = vmatpush2.msra.mxu0 0.0
    %1016 = vmatprep.subr.mxu0 0.0
    %1017 = vmatpush2.msra.mxu0 0.0
    %1018 = vmatprep.subr.mxu0 0.0
    %1019 = vmatpush2.msra.mxu0 0.0
    %1020 = vmatprep.subr.mxu0 0.0
    %1021 = vmatpush2.msra.mxu0 0.0
    %1022 = vmatprep.subr.mxu0 0.0
    %1023 = vmatpush2.msra.mxu0 0.0
    %1024 = vmatprep.subr.mxu0 0.0
    %1025 = vmatpush2.msra.mxu0 0.0
    %1026 = vmatprep.subr.mxu0 0.0
    %1027 = vmatpush2.msra.mxu0 0.0
    %1028 = vmatprep.subr.mxu0 0.0
    %1029 = vmatpush2.msra.mxu0 0.0
    %1030 = vmatprep.subr.mxu0 0.0
    %1031 = vmatpush2.msra.mxu0 0.0
    %1032 = vmatprep.subr.mxu0 0.0
    %1033 = vmatpush2.msra.mxu0 0.0
    %1034 = vmatprep.subr.mxu0 0.0
    %1035 = vmatpush2.msra.mxu0 0.0
    %1036 = vmatprep.subr.mxu0 0.0
    %1037 = vmatpush2.msra.mxu0 0.0
    %1038 = vmatprep.mubr.f32.mxu0 0.0
    %1039 = vmatmul.mubr.f32.gmra.mxu0 %v438
    %v1040 = vpop.f32.mrf.mxu0
    %v1041 = vadd.f32 %v759, %v1040
    %v1042 = vpop.f32.mrf.mxu0
    %1043 = vdwg.mxu0
    %vm1044 = vcmask 64512
    %v1046 = vsel %vm1044, %v180, 0
    %v1049 = vsel %vm1044, %v507, 0
    %1051 = vmatprep.subr.mxu0 0.0
    %1052 = vmatpush1.xpose.msra.mxu0 0.0
    %1053 = vmatprep.subr.mxu0 0.0
    %1054 = vmatpush1.xpose.msra.mxu0 0.0
    %1055 = vmatprep.subr.mxu0 0.0
    %1056 = vmatpush1.xpose.msra.mxu0 0.0
    %1057 = vmatprep.subr.mxu0 0.0
    %1058 = vmatpush1.xpose.msra.mxu0 0.0
    %1059 = vmatprep.subr.mxu0 0.0
    %1060 = vmatpush1.xpose.msra.mxu0 0.0
    %1061 = vmatprep.subr.mxu0 0.0
    %1062 = vmatpush1.xpose.msra.mxu0 0.0
    %1063 = vmatprep.subr.mxu0 0.0
    %1064 = vmatpush1.xpose.msra.mxu0 0.0
    %1065 = vmatprep.subr.mxu0 0.0
    %1066 = vmatpush1.xpose.msra.mxu0 0.0
    %1067 = vmatprep.subr.mxu0 0.0
    %1068 = vmatpush1.xpose.msra.mxu0 0.0
    %1069 = vmatprep.subr.mxu0 0.0
    %1070 = vmatpush1.xpose.msra.mxu0 0.0
    %1071 = vmatprep.subr.mxu0 0.0
    %1072 = vmatpush1.xpose.msra.mxu0 0.0
    %1073 = vmatprep.subr.mxu0 0.0
    %1074 = vmatpush1.xpose.msra.mxu0 0.0
    %1075 = vmatprep.subr.mxu0 0.0
    %1076 = vmatpush1.xpose.msra.mxu0 0.0
    %1077 = vmatprep.subr.mxu0 0.0
    %1078 = vmatpush1.xpose.msra.mxu0 0.0
    %1079 = vmatprep.subr.mxu0 0.0
    %1080 = vmatpush1.xpose.msra.mxu0 0.0
    %1081 = vmatprep.subr.mxu0 0.0
    %1082 = vmatpush1.xpose.msra.mxu0 %v1049
    %1083 = vmatprep.subr.mxu0 0.0
    %1084 = vmatpush2.xpose.msra.mxu0 0.0
    %1085 = vmatprep.subr.mxu0 0.0
    %1086 = vmatpush2.xpose.msra.mxu0 0.0
    %1087 = vmatprep.subr.mxu0 0.0
    %1088 = vmatpush2.xpose.msra.mxu0 0.0
    %1089 = vmatprep.subr.mxu0 0.0
    %1090 = vmatpush2.xpose.msra.mxu0 0.0
    %1091 = vmatprep.subr.mxu0 0.0
    %1092 = vmatpush2.xpose.msra.mxu0 0.0
    %1093 = vmatprep.subr.mxu0 0.0
    %1094 = vmatpush2.xpose.msra.mxu0 0.0
    %1095 = vmatprep.subr.mxu0 0.0
    %1096 = vmatpush2.xpose.msra.mxu0 0.0
    %1097 = vmatprep.subr.mxu0 0.0
    %1098 = vmatpush2.xpose.msra.mxu0 0.0
    %1099 = vmatprep.subr.mxu0 0.0
    %1100 = vmatpush2.xpose.msra.mxu0 0.0
    %1101 = vmatprep.subr.mxu0 0.0
    %1102 = vmatpush2.xpose.msra.mxu0 0.0
    %1103 = vmatprep.subr.mxu0 0.0
    %1104 = vmatpush2.xpose.msra.mxu0 0.0
    %1105 = vmatprep.subr.mxu0 0.0
    %1106 = vmatpush2.xpose.msra.mxu0 0.0
    %1107 = vmatprep.subr.mxu0 0.0
    %1108 = vmatpush2.xpose.msra.mxu0 0.0
    %1109 = vmatprep.subr.mxu0 0.0
    %1110 = vmatpush2.xpose.msra.mxu0 0.0
    %1111 = vmatprep.subr.mxu0 0.0
    %1112 = vmatpush2.xpose.msra.mxu0 0.0
    %1113 = vmatprep.subr.mxu0 0.0
    %1114 = vmatpush2.xpose.msra.mxu0 0.0
    %1115 = vmatprep.mubr.f32.mxu0 0.0
    %1116 = vmatmul.mubr.f32.gmra.mxu0 %v1046
    %v1117 = vpop.f32.mrf.mxu0
    %v1118 = vadd.f32 %v64, %v1117
    %v1119 = vpop.f32.mrf.mxu0
    %1120 = vdwg.mxu0
    %v1122 = vsel %vm1044, %v250, 0
    %v1125 = vsel %vm1044, %v577, 0
    %1127 = vmatprep.subr.mxu0 0.0
    %1128 = vmatpush1.xpose.msra.mxu0 0.0
    %1129 = vmatprep.subr.mxu0 0.0
    %1130 = vmatpush1.xpose.msra.mxu0 0.0
    %1131 = vmatprep.subr.mxu0 0.0
    %1132 = vmatpush1.xpose.msra.mxu0 0.0
    %1133 = vmatprep.subr.mxu0 0.0
    %1134 = vmatpush1.xpose.msra.mxu0 0.0
    %1135 = vmatprep.subr.mxu0 0.0
    %1136 = vmatpush1.xpose.msra.mxu0 0.0
    %1137 = vmatprep.subr.mxu0 0.0
    %1138 = vmatpush1.xpose.msra.mxu0 0.0
    %1139 = vmatprep.subr.mxu0 0.0
    %1140 = vmatpush1.xpose.msra.mxu0 0.0
    %1141 = vmatprep.subr.mxu0 0.0
    %1142 = vmatpush1.xpose.msra.mxu0 0.0
    %1143 = vmatprep.subr.mxu0 0.0
    %1144 = vmatpush1.xpose.msra.mxu0 0.0
    %1145 = vmatprep.subr.mxu0 0.0
    %1146 = vmatpush1.xpose.msra.mxu0 0.0
    %1147 = vmatprep.subr.mxu0 0.0
    %1148 = vmatpush1.xpose.msra.mxu0 0.0
    %1149 = vmatprep.subr.mxu0 0.0
    %1150 = vmatpush1.xpose.msra.mxu0 0.0
    %1151 = vmatprep.subr.mxu0 0.0
    %1152 = vmatpush1.xpose.msra.mxu0 0.0
    %1153 = vmatprep.subr.mxu0 0.0
    %1154 = vmatpush1.xpose.msra.mxu0 0.0
    %1155 = vmatprep.subr.mxu0 0.0
    %1156 = vmatpush1.xpose.msra.mxu0 0.0
    %1157 = vmatprep.subr.mxu0 0.0
    %1158 = vmatpush1.xpose.msra.mxu0 %v1125
    %1159 = vmatprep.subr.mxu0 0.0
    %1160 = vmatpush2.xpose.msra.mxu0 0.0
    %1161 = vmatprep.subr.mxu0 0.0
    %1162 = vmatpush2.xpose.msra.mxu0 0.0
    %1163 = vmatprep.subr.mxu0 0.0
    %1164 = vmatpush2.xpose.msra.mxu0 0.0
    %1165 = vmatprep.subr.mxu0 0.0
    %1166 = vmatpush2.xpose.msra.mxu0 0.0
    %1167 = vmatprep.subr.mxu0 0.0
    %1168 = vmatpush2.xpose.msra.mxu0 0.0
    %1169 = vmatprep.subr.mxu0 0.0
    %1170 = vmatpush2.xpose.msra.mxu0 0.0
    %1171 = vmatprep.subr.mxu0 0.0
    %1172 = vmatpush2.xpose.msra.mxu0 0.0
    %1173 = vmatprep.subr.mxu0 0.0
    %1174 = vmatpush2.xpose.msra.mxu0 0.0
    %1175 = vmatprep.subr.mxu0 0.0
    %1176 = vmatpush2.xpose.msra.mxu0 0.0
    %1177 = vmatprep.subr.mxu0 0.0
    %1178 = vmatpush2.xpose.msra.mxu0 0.0
    %1179 = vmatprep.subr.mxu0 0.0
    %1180 = vmatpush2.xpose.msra.mxu0 0.0
    %1181 = vmatprep.subr.mxu0 0.0
    %1182 = vmatpush2.xpose.msra.mxu0 0.0
    %1183 = vmatprep.subr.mxu0 0.0
    %1184 = vmatpush2.xpose.msra.mxu0 0.0
    %1185 = vmatprep.subr.mxu0 0.0
    %1186 = vmatpush2.xpose.msra.mxu0 0.0
    %1187 = vmatprep.subr.mxu0 0.0
    %1188 = vmatpush2.xpose.msra.mxu0 0.0
    %1189 = vmatprep.subr.mxu0 0.0
    %1190 = vmatpush2.xpose.msra.mxu0 0.0
    %1191 = vmatprep.mubr.f32.mxu0 0.0
    %1192 = vmatmul.mubr.f32.gmra.mxu0 %v1122
    %v1193 = vpop.f32.mrf.mxu0
    %v1194 = vadd.f32 %v64, %v1193
    %v1195 = vpop.f32.mrf.mxu0
    %1196 = vdwg.mxu0
    %v1198 = vsel %vm1044, %v320, 0
    %v1201 = vsel %vm1044, %v647, 0
    %1203 = vmatprep.subr.mxu0 0.0
    %1204 = vmatpush1.xpose.msra.mxu0 0.0
    %1205 = vmatprep.subr.mxu0 0.0
    %1206 = vmatpush1.xpose.msra.mxu0 0.0
    %1207 = vmatprep.subr.mxu0 0.0
    %1208 = vmatpush1.xpose.msra.mxu0 0.0
    %1209 = vmatprep.subr.mxu0 0.0
    %1210 = vmatpush1.xpose.msra.mxu0 0.0
    %1211 = vmatprep.subr.mxu0 0.0
    %1212 = vmatpush1.xpose.msra.mxu0 0.0
    %1213 = vmatprep.subr.mxu0 0.0
    %1214 = vmatpush1.xpose.msra.mxu0 0.0
    %1215 = vmatprep.subr.mxu0 0.0
    %1216 = vmatpush1.xpose.msra.mxu0 0.0
    %1217 = vmatprep.subr.mxu0 0.0
    %1218 = vmatpush1.xpose.msra.mxu0 0.0
    %1219 = vmatprep.subr.mxu0 0.0
    %1220 = vmatpush1.xpose.msra.mxu0 0.0
    %1221 = vmatprep.subr.mxu0 0.0
    %1222 = vmatpush1.xpose.msra.mxu0 0.0
    %1223 = vmatprep.subr.mxu0 0.0
    %1224 = vmatpush1.xpose.msra.mxu0 0.0
    %1225 = vmatprep.subr.mxu0 0.0
    %1226 = vmatpush1.xpose.msra.mxu0 0.0
    %1227 = vmatprep.subr.mxu0 0.0
    %1228 = vmatpush1.xpose.msra.mxu0 0.0
    %1229 = vmatprep.subr.mxu0 0.0
    %1230 = vmatpush1.xpose.msra.mxu0 0.0
    %1231 = vmatprep.subr.mxu0 0.0
    %1232 = vmatpush1.xpose.msra.mxu0 0.0
    %1233 = vmatprep.subr.mxu0 0.0
    %1234 = vmatpush1.xpose.msra.mxu0 %v1201
    %1235 = vmatprep.subr.mxu0 0.0
    %1236 = vmatpush2.xpose.msra.mxu0 0.0
    %1237 = vmatprep.subr.mxu0 0.0
    %1238 = vmatpush2.xpose.msra.mxu0 0.0
    %1239 = vmatprep.subr.mxu0 0.0
    %1240 = vmatpush2.xpose.msra.mxu0 0.0
    %1241 = vmatprep.subr.mxu0 0.0
    %1242 = vmatpush2.xpose.msra.mxu0 0.0
    %1243 = vmatprep.subr.mxu0 0.0
    %1244 = vmatpush2.xpose.msra.mxu0 0.0
    %1245 = vmatprep.subr.mxu0 0.0
    %1246 = vmatpush2.xpose.msra.mxu0 0.0
    %1247 = vmatprep.subr.mxu0 0.0
    %1248 = vmatpush2.xpose.msra.mxu0 0.0
    %1249 = vmatprep.subr.mxu0 0.0
    %1250 = vmatpush2.xpose.msra.mxu0 0.0
    %1251 = vmatprep.subr.mxu0 0.0
    %1252 = vmatpush2.xpose.msra.mxu0 0.0
    %1253 = vmatprep.subr.mxu0 0.0
    %1254 = vmatpush2.xpose.msra.mxu0 0.0
    %1255 = vmatprep.subr.mxu0 0.0
    %1256 = vmatpush2.xpose.msra.mxu0 0.0
    %1257 = vmatprep.subr.mxu0 0.0
    %1258 = vmatpush2.xpose.msra.mxu0 0.0
    %1259 = vmatprep.subr.mxu0 0.0
    %1260 = vmatpush2.xpose.msra.mxu0 0.0
    %1261 = vmatprep.subr.mxu0 0.0
    %1262 = vmatpush2.xpose.msra.mxu0 0.0
    %1263 = vmatprep.subr.mxu0 0.0
    %1264 = vmatpush2.xpose.msra.mxu0 0.0
    %1265 = vmatprep.subr.mxu0 0.0
    %1266 = vmatpush2.xpose.msra.mxu0 0.0
    %1267 = vmatprep.mubr.f32.mxu0 0.0
    %1268 = vmatmul.mubr.f32.gmra.mxu0 %v1198
    %v1269 = vpop.f32.mrf.mxu0
    %v1270 = vadd.f32 %v64, %v1269
    %v1271 = vpop.f32.mrf.mxu0
    %1272 = vdwg.mxu0
    %v1274 = vsel %vm1044, %v390, 0
    %v1277 = vsel %vm1044, %v717, 0
    %1279 = vmatprep.subr.mxu0 0.0
    %1280 = vmatpush1.xpose.msra.mxu0 0.0
    %1281 = vmatprep.subr.mxu0 0.0
    %1282 = vmatpush1.xpose.msra.mxu0 0.0
    %1283 = vmatprep.subr.mxu0 0.0
    %1284 = vmatpush1.xpose.msra.mxu0 0.0
    %1285 = vmatprep.subr.mxu0 0.0
    %1286 = vmatpush1.xpose.msra.mxu0 0.0
    %1287 = vmatprep.subr.mxu0 0.0
    %1288 = vmatpush1.xpose.msra.mxu0 0.0
    %1289 = vmatprep.subr.mxu0 0.0
    %1290 = vmatpush1.xpose.msra.mxu0 0.0
    %1291 = vmatprep.subr.mxu0 0.0
    %1292 = vmatpush1.xpose.msra.mxu0 0.0
    %1293 = vmatprep.subr.mxu0 0.0
    %1294 = vmatpush1.xpose.msra.mxu0 0.0
    %1295 = vmatprep.subr.mxu0 0.0
    %1296 = vmatpush1.xpose.msra.mxu0 0.0
    %1297 = vmatprep.subr.mxu0 0.0
    %1298 = vmatpush1.xpose.msra.mxu0 0.0
    %1299 = vmatprep.subr.mxu0 0.0
    %1300 = vmatpush1.xpose.msra.mxu0 0.0
    %1301 = vmatprep.subr.mxu0 0.0
    %1302 = vmatpush1.xpose.msra.mxu0 0.0
    %1303 = vmatprep.subr.mxu0 0.0
    %1304 = vmatpush1.xpose.msra.mxu0 0.0
    %1305 = vmatprep.subr.mxu0 0.0
    %1306 = vmatpush1.xpose.msra.mxu0 0.0
    %1307 = vmatprep.subr.mxu0 0.0
    %1308 = vmatpush1.xpose.msra.mxu0 0.0
    %1309 = vmatprep.subr.mxu0 0.0
    %1310 = vmatpush1.xpose.msra.mxu0 %v1277
    %1311 = vmatprep.subr.mxu0 0.0
    %1312 = vmatpush2.xpose.msra.mxu0 0.0
    %1313 = vmatprep.subr.mxu0 0.0
    %1314 = vmatpush2.xpose.msra.mxu0 0.0
    %1315 = vmatprep.subr.mxu0 0.0
    %1316 = vmatpush2.xpose.msra.mxu0 0.0
    %1317 = vmatprep.subr.mxu0 0.0
    %1318 = vmatpush2.xpose.msra.mxu0 0.0
    %1319 = vmatprep.subr.mxu0 0.0
    %1320 = vmatpush2.xpose.msra.mxu0 0.0
    %1321 = vmatprep.subr.mxu0 0.0
    %1322 = vmatpush2.xpose.msra.mxu0 0.0
    %1323 = vmatprep.subr.mxu0 0.0
    %1324 = vmatpush2.xpose.msra.mxu0 0.0
    %1325 = vmatprep.subr.mxu0 0.0
    %1326 = vmatpush2.xpose.msra.mxu0 0.0
    %1327 = vmatprep.subr.mxu0 0.0
    %1328 = vmatpush2.xpose.msra.mxu0 0.0
    %1329 = vmatprep.subr.mxu0 0.0
    %1330 = vmatpush2.xpose.msra.mxu0 0.0
    %1331 = vmatprep.subr.mxu0 0.0
    %1332 = vmatpush2.xpose.msra.mxu0 0.0
    %1333 = vmatprep.subr.mxu0 0.0
    %1334 = vmatpush2.xpose.msra.mxu0 0.0
    %1335 = vmatprep.subr.mxu0 0.0
    %1336 = vmatpush2.xpose.msra.mxu0 0.0
    %1337 = vmatprep.subr.mxu0 0.0
    %1338 = vmatpush2.xpose.msra.mxu0 0.0
    %1339 = vmatprep.subr.mxu0 0.0
    %1340 = vmatpush2.xpose.msra.mxu0 0.0
    %1341 = vmatprep.subr.mxu0 0.0
    %1342 = vmatpush2.xpose.msra.mxu0 0.0
    %1343 = vmatprep.mubr.f32.mxu0 0.0
    %1344 = vmatmul.mubr.f32.gmra.mxu0 %v1274
    %v1345 = vpop.f32.mrf.mxu0
    %v1346 = vadd.f32 %v64, %v1345
    %v1347 = vpop.f32.mrf.mxu0
    %1348 = vdwg.mxu0
    %v1349 = vsel %vm1044, %v1118, -inf
    %1350 = vmax.xlane.f32.xlu0 %v1349
    %v1351 = vpop.xlane.xlu0 %1350
    %v1352 = vsel %vm1044, %v1194, -inf
    %1353 = vmax.xlane.f32.xlu0 %v1352
    %v1354 = vpop.xlane.xlu0 %1353
    %v1355 = vsel %vm1044, %v1270, -inf
    %1356 = vmax.xlane.f32.xlu0 %v1355
    %v1357 = vpop.xlane.xlu0 %1356
    %v1358 = vsel %vm1044, %v1346, -inf
    %1359 = vmax.xlane.f32.xlu0 %v1358
    %v1360 = vpop.xlane.xlu0 %1359
    %v1361 = vsub.f32 %v1118, %v1351
    %v1362 = vsub.f32 %v1194, %v1354
    %v1363 = vsub.f32 %v1270, %v1357
    %v1364 = vsub.f32 %v1346, %v1360
    %v1365 = vmul.f32 %v1361, 1.442695
    %v1366 = vpow.pop %v1365
    %v1367 = vmul.f32 %v1362, 1.442695
    %v1368 = vpow.pop %v1367
    %v1369 = vmul.f32 %v1363, 1.442695
    %v1370 = vpow.pop %v1369
    %v1371 = vmul.f32 %v1364, 1.442695
    %v1372 = vpow.pop %v1371
    %v1373 = vsel %vm1044, %v1366, 0.0
    %1374 = vadd.xlane.f32.xlu0 %v1373
    %v1375 = vpop.xlane.xlu0 %1374
    %v1376 = vsel %vm1044, %v1368, 0.0
    %1377 = vadd.xlane.f32.xlu0 %v1376
    %v1378 = vpop.xlane.xlu0 %1377
    %v1379 = vsel %vm1044, %v1370, 0.0
    %1380 = vadd.xlane.f32.xlu0 %v1379
    %v1381 = vpop.xlane.xlu0 %1380
    %v1382 = vsel %vm1044, %v1372, 0.0
    %1383 = vadd.xlane.f32.xlu0 %v1382
    %v1384 = vpop.xlane.xlu0 %1383
    %v1385 = vrcp.pop %v1375
    %v1386 = vrcp.pop %v1378
    %v1387 = vrcp.pop %v1381
    %v1388 = vrcp.pop %v1384
    %v1389 = vmul.f32 %v1366, %v1385
    %v1390 = vmul.f32 %v1368, %v1386
    %v1391 = vmul.f32 %v1370, %v1387
    %v1392 = vmul.f32 %v1372, %v1388
    %v1394 = vsel %vm1044, %v1389, 0
    %1396 = vmatprep.subr.mxu0 0.0
    %1397 = vmatpush1.msra.mxu0 0.0
    %1398 = vmatprep.subr.mxu0 0.0
    %1399 = vmatpush1.msra.mxu0 0.0
    %1400 = vmatprep.subr.mxu0 0.0
    %1401 = vmatpush1.msra.mxu0 0.0
    %1402 = vmatprep.subr.mxu0 0.0
    %1403 = vmatpush1.msra.mxu0 0.0
    %1404 = vmatprep.subr.mxu0 0.0
    %1405 = vmatpush1.msra.mxu0 0.0
    %1406 = vmatprep.subr.mxu0 0.0
    %1407 = vmatpush1.msra.mxu0 0.0
    %1408 = vmatprep.subr.mxu0 0.0
    %1409 = vmatpush1.msra.mxu0 0.0
    %1410 = vmatprep.subr.mxu0 0.0
    %1411 = vmatpush1.msra.mxu0 0.0
    %1412 = vmatprep.subr.mxu0 0.0
    %1413 = vmatpush1.msra.mxu0 0.0
    %1414 = vmatprep.subr.mxu0 0.0
    %1415 = vmatpush1.msra.mxu0 0.0
    %1416 = vmatprep.subr.mxu0 0.0
    %1417 = vmatpush1.msra.mxu0 0.0
    %1418 = vmatprep.subr.mxu0 0.0
    %1419 = vmatpush1.msra.mxu0 0.0
    %1420 = vmatprep.subr.mxu0 0.0
    %1421 = vmatpush1.msra.mxu0 0.0
    %1422 = vmatprep.subr.mxu0 0.0
    %1423 = vmatpush1.msra.mxu0 0.0
    %1424 = vmatprep.subr.mxu0 0.0
    %1425 = vmatpush1.msra.mxu0 0.0
    %1426 = vmatprep.subr.mxu0 0.0
    %1427 = vmatpush1.msra.mxu0 %v831
    %1428 = vmatprep.subr.mxu0 0.0
    %1429 = vmatpush2.msra.mxu0 0.0
    %1430 = vmatprep.subr.mxu0 0.0
    %1431 = vmatpush2.msra.mxu0 0.0
    %1432 = vmatprep.subr.mxu0 0.0
    %1433 = vmatpush2.msra.mxu0 0.0
    %1434 = vmatprep.subr.mxu0 0.0
    %1435 = vmatpush2.msra.mxu0 0.0
    %1436 = vmatprep.subr.mxu0 0.0
    %1437 = vmatpush2.msra.mxu0 0.0
    %1438 = vmatprep.subr.mxu0 0.0
    %1439 = vmatpush2.msra.mxu0 0.0
    %1440 = vmatprep.subr.mxu0 0.0
    %1441 = vmatpush2.msra.mxu0 0.0
    %1442 = vmatprep.subr.mxu0 0.0
    %1443 = vmatpush2.msra.mxu0 0.0
    %1444 = vmatprep.subr.mxu0 0.0
    %1445 = vmatpush2.msra.mxu0 0.0
    %1446 = vmatprep.subr.mxu0 0.0
    %1447 = vmatpush2.msra.mxu0 0.0
    %1448 = vmatprep.subr.mxu0 0.0
    %1449 = vmatpush2.msra.mxu0 0.0
    %1450 = vmatprep.subr.mxu0 0.0
    %1451 = vmatpush2.msra.mxu0 0.0
    %1452 = vmatprep.subr.mxu0 0.0
    %1453 = vmatpush2.msra.mxu0 0.0
    %1454 = vmatprep.subr.mxu0 0.0
    %1455 = vmatpush2.msra.mxu0 0.0
    %1456 = vmatprep.subr.mxu0 0.0
    %1457 = vmatpush2.msra.mxu0 0.0
    %1458 = vmatprep.subr.mxu0 0.0
    %1459 = vmatpush2.msra.mxu0 0.0
    %1460 = vmatprep.mubr.f32.mxu0 0.0
    %1461 = vmatmul.mubr.f32.gmra.mxu0 %v1394
    %v1462 = vpop.f32.mrf.mxu0
    %v1463 = vadd.f32 0.0, %v1462
    %v1464 = vpop.f32.mrf.mxu0
    %1465 = vdwg.mxu0
    %v1467 = vsel %vm1044, %v1390, 0
    %1469 = vmatprep.subr.mxu0 0.0
    %1470 = vmatpush1.msra.mxu0 0.0
    %1471 = vmatprep.subr.mxu0 0.0
    %1472 = vmatpush1.msra.mxu0 0.0
    %1473 = vmatprep.subr.mxu0 0.0
    %1474 = vmatpush1.msra.mxu0 0.0
    %1475 = vmatprep.subr.mxu0 0.0
    %1476 = vmatpush1.msra.mxu0 0.0
    %1477 = vmatprep.subr.mxu0 0.0
    %1478 = vmatpush1.msra.mxu0 0.0
    %1479 = vmatprep.subr.mxu0 0.0
    %1480 = vmatpush1.msra.mxu0 0.0
    %1481 = vmatprep.subr.mxu0 0.0
    %1482 = vmatpush1.msra.mxu0 0.0
    %1483 = vmatprep.subr.mxu0 0.0
    %1484 = vmatpush1.msra.mxu0 0.0
    %1485 = vmatprep.subr.mxu0 0.0
    %1486 = vmatpush1.msra.mxu0 0.0
    %1487 = vmatprep.subr.mxu0 0.0
    %1488 = vmatpush1.msra.mxu0 0.0
    %1489 = vmatprep.subr.mxu0 0.0
    %1490 = vmatpush1.msra.mxu0 0.0
    %1491 = vmatprep.subr.mxu0 0.0
    %1492 = vmatpush1.msra.mxu0 0.0
    %1493 = vmatprep.subr.mxu0 0.0
    %1494 = vmatpush1.msra.mxu0 0.0
    %1495 = vmatprep.subr.mxu0 0.0
    %1496 = vmatpush1.msra.mxu0 0.0
    %1497 = vmatprep.subr.mxu0 0.0
    %1498 = vmatpush1.msra.mxu0 0.0
    %1499 = vmatprep.subr.mxu0 0.0
    %1500 = vmatpush1.msra.mxu0 %v901
    %1501 = vmatprep.subr.mxu0 0.0
    %1502 = vmatpush2.msra.mxu0 0.0
    %1503 = vmatprep.subr.mxu0 0.0
    %1504 = vmatpush2.msra.mxu0 0.0
    %1505 = vmatprep.subr.mxu0 0.0
    %1506 = vmatpush2.msra.mxu0 0.0
    %1507 = vmatprep.subr.mxu0 0.0
    %1508 = vmatpush2.msra.mxu0 0.0
    %1509 = vmatprep.subr.mxu0 0.0
    %1510 = vmatpush2.msra.mxu0 0.0
    %1511 = vmatprep.subr.mxu0 0.0
    %1512 = vmatpush2.msra.mxu0 0.0
    %1513 = vmatprep.subr.mxu0 0.0
    %1514 = vmatpush2.msra.mxu0 0.0
    %1515 = vmatprep.subr.mxu0 0.0
    %1516 = vmatpush2.msra.mxu0 0.0
    %1517 = vmatprep.subr.mxu0 0.0
    %1518 = vmatpush2.msra.mxu0 0.0
    %1519 = vmatprep.subr.mxu0 0.0
    %1520 = vmatpush2.msra.mxu0 0.0
    %1521 = vmatprep.subr.mxu0 0.0
    %1522 = vmatpush2.msra.mxu0 0.0
    %1523 = vmatprep.subr.mxu0 0.0
    %1524 = vmatpush2.msra.mxu0 0.0
    %1525 = vmatprep.subr.mxu0 0.0
    %1526 = vmatpush2.msra.mxu0 0.0
    %1527 = vmatprep.subr.mxu0 0.0
    %1528 = vmatpush2.msra.mxu0 0.0
    %1529 = vmatprep.subr.mxu0 0.0
    %1530 = vmatpush2.msra.mxu0 0.0
    %1531 = vmatprep.subr.mxu0 0.0
    %1532 = vmatpush2.msra.mxu0 0.0
    %1533 = vmatprep.mubr.f32.mxu0 0.0
    %1534 = vmatmul.mubr.f32.gmra.mxu0 %v1467
    %v1535 = vpop.f32.mrf.mxu0
    %v1536 = vadd.f32 0.0, %v1535
    %v1537 = vpop.f32.mrf.mxu0
    %1538 = vdwg.mxu0
    %v1540 = vsel %vm1044, %v1391, 0
    %1542 = vmatprep.subr.mxu0 0.0
    %1543 = vmatpush1.msra.mxu0 0.0
    %1544 = vmatprep.subr.mxu0 0.0
    %1545 = vmatpush1.msra.mxu0 0.0
    %1546 = vmatprep.subr.mxu0 0.0
    %1547 = vmatpush1.msra.mxu0 0.0
    %1548 = vmatprep.subr.mxu0 0.0
    %1549 = vmatpush1.msra.mxu0 0.0
    %1550 = vmatprep.subr.mxu0 0.0
    %1551 = vmatpush1.msra.mxu0 0.0
    %1552 = vmatprep.subr.mxu0 0.0
    %1553 = vmatpush1.msra.mxu0 0.0
    %1554 = vmatprep.subr.mxu0 0.0
    %1555 = vmatpush1.msra.mxu0 0.0
    %1556 = vmatprep.subr.mxu0 0.0
    %1557 = vmatpush1.msra.mxu0 0.0
    %1558 = vmatprep.subr.mxu0 0.0
    %1559 = vmatpush1.msra.mxu0 0.0
    %1560 = vmatprep.subr.mxu0 0.0
    %1561 = vmatpush1.msra.mxu0 0.0
    %1562 = vmatprep.subr.mxu0 0.0
    %1563 = vmatpush1.msra.mxu0 0.0
    %1564 = vmatprep.subr.mxu0 0.0
    %1565 = vmatpush1.msra.mxu0 0.0
    %1566 = vmatprep.subr.mxu0 0.0
    %1567 = vmatpush1.msra.mxu0 0.0
    %1568 = vmatprep.subr.mxu0 0.0
    %1569 = vmatpush1.msra.mxu0 0.0
    %1570 = vmatprep.subr.mxu0 0.0
    %1571 = vmatpush1.msra.mxu0 0.0
    %1572 = vmatprep.subr.mxu0 0.0
    %1573 = vmatpush1.msra.mxu0 %v971
    %1574 = vmatprep.subr.mxu0 0.0
    %1575 = vmatpush2.msra.mxu0 0.0
    %1576 = vmatprep.subr.mxu0 0.0
    %1577 = vmatpush2.msra.mxu0 0.0
    %1578 = vmatprep.subr.mxu0 0.0
    %1579 = vmatpush2.msra.mxu0 0.0
    %1580 = vmatprep.subr.mxu0 0.0
    %1581 = vmatpush2.msra.mxu0 0.0
    %1582 = vmatprep.subr.mxu0 0.0
    %1583 = vmatpush2.msra.mxu0 0.0
    %1584 = vmatprep.subr.mxu0 0.0
    %1585 = vmatpush2.msra.mxu0 0.0
    %1586 = vmatprep.subr.mxu0 0.0
    %1587 = vmatpush2.msra.mxu0 0.0
    %1588 = vmatprep.subr.mxu0 0.0
    %1589 = vmatpush2.msra.mxu0 0.0
    %1590 = vmatprep.subr.mxu0 0.0
    %1591 = vmatpush2.msra.mxu0 0.0
    %1592 = vmatprep.subr.mxu0 0.0
    %1593 = vmatpush2.msra.mxu0 0.0
    %1594 = vmatprep.subr.mxu0 0.0
    %1595 = vmatpush2.msra.mxu0 0.0
    %1596 = vmatprep.subr.mxu0 0.0
    %1597 = vmatpush2.msra.mxu0 0.0
    %1598 = vmatprep.subr.mxu0 0.0
    %1599 = vmatpush2.msra.mxu0 0.0
    %1600 = vmatprep.subr.mxu0 0.0
    %1601 = vmatpush2.msra.mxu0 0.0
    %1602 = vmatprep.subr.mxu0 0.0
    %1603 = vmatpush2.msra.mxu0 0.0
    %1604 = vmatprep.subr.mxu0 0.0
    %1605 = vmatpush2.msra.mxu0 0.0
    %1606 = vmatprep.mubr.f32.mxu0 0.0
    %1607 = vmatmul.mubr.f32.gmra.mxu0 %v1540
    %v1608 = vpop.f32.mrf.mxu0
    %v1609 = vadd.f32 0.0, %v1608
    %v1610 = vpop.f32.mrf.mxu0
    %1611 = vdwg.mxu0
    %v1613 = vsel %vm1044, %v1392, 0
    %1615 = vmatprep.subr.mxu0 0.0
    %1616 = vmatpush1.msra.mxu0 0.0
    %1617 = vmatprep.subr.mxu0 0.0
    %1618 = vmatpush1.msra.mxu0 0.0
    %1619 = vmatprep.subr.mxu0 0.0
    %1620 = vmatpush1.msra.mxu0 0.0
    %1621 = vmatprep.subr.mxu0 0.0
    %1622 = vmatpush1.msra.mxu0 0.0
    %1623 = vmatprep.subr.mxu0 0.0
    %1624 = vmatpush1.msra.mxu0 0.0
    %1625 = vmatprep.subr.mxu0 0.0
    %1626 = vmatpush1.msra.mxu0 0.0
    %1627 = vmatprep.subr.mxu0 0.0
    %1628 = vmatpush1.msra.mxu0 0.0
    %1629 = vmatprep.subr.mxu0 0.0
    %1630 = vmatpush1.msra.mxu0 0.0
    %1631 = vmatprep.subr.mxu0 0.0
    %1632 = vmatpush1.msra.mxu0 0.0
    %1633 = vmatprep.subr.mxu0 0.0
    %1634 = vmatpush1.msra.mxu0 0.0
    %1635 = vmatprep.subr.mxu0 0.0
    %1636 = vmatpush1.msra.mxu0 0.0
    %1637 = vmatprep.subr.mxu0 0.0
    %1638 = vmatpush1.msra.mxu0 0.0
    %1639 = vmatprep.subr.mxu0 0.0
    %1640 = vmatpush1.msra.mxu0 0.0
    %1641 = vmatprep.subr.mxu0 0.0
    %1642 = vmatpush1.msra.mxu0 0.0
    %1643 = vmatprep.subr.mxu0 0.0
    %1644 = vmatpush1.msra.mxu0 0.0
    %1645 = vmatprep.subr.mxu0 0.0
    %1646 = vmatpush1.msra.mxu0 %v1041
    %1647 = vmatprep.subr.mxu0 0.0
    %1648 = vmatpush2.msra.mxu0 0.0
    %1649 = vmatprep.subr.mxu0 0.0
    %1650 = vmatpush2.msra.mxu0 0.0
    %1651 = vmatprep.subr.mxu0 0.0
    %1652 = vmatpush2.msra.mxu0 0.0
    %1653 = vmatprep.subr.mxu0 0.0
    %1654 = vmatpush2.msra.mxu0 0.0
    %1655 = vmatprep.subr.mxu0 0.0
    %1656 = vmatpush2.msra.mxu0 0.0
    %1657 = vmatprep.subr.mxu0 0.0
    %1658 = vmatpush2.msra.mxu0 0.0
    %1659 = vmatprep.subr.mxu0 0.0
    %1660 = vmatpush2.msra.mxu0 0.0
    %1661 = vmatprep.subr.mxu0 0.0
    %1662 = vmatpush2.msra.mxu0 0.0
    %1663 = vmatprep.subr.mxu0 0.0
    %1664 = vmatpush2.msra.mxu0 0.0
    %1665 = vmatprep.subr.mxu0 0.0
    %1666 = vmatpush2.msra.mxu0 0.0
    %1667 = vmatprep.subr.mxu0 0.0
    %1668 = vmatpush2.msra.mxu0 0.0
    %1669 = vmatprep.subr.mxu0 0.0
    %1670 = vmatpush2.msra.mxu0 0.0
    %1671 = vmatprep.subr.mxu0 0.0
    %1672 = vmatpush2.msra.mxu0 0.0
    %1673 = vmatprep.subr.mxu0 0.0
    %1674 = vmatpush2.msra.mxu0 0.0
    %1675 = vmatprep.subr.mxu0 0.0
    %1676 = vmatpush2.msra.mxu0 0.0
    %1677 = vmatprep.subr.mxu0 0.0
    %1678 = vmatpush2.msra.mxu0 0.0
    %1679 = vmatprep.mubr.f32.mxu0 0.0
    %1680 = vmatmul.mubr.f32.gmra.mxu0 %v1613
    %v1681 = vpop.f32.mrf.mxu0
    %v1682 = vadd.f32 0.0, %v1681
    %v1683 = vpop.f32.mrf.mxu0
    %1684 = vdwg.mxu0
    %v1685 = vld [vmem:[%s8] sm:$0xff]
    %v1686 = vld [vmem:[%s8 + $0x8] sm:$0xff]
    %v1687 = vld [vmem:[%s8 + $0x10] sm:$0xff]
    %v1688 = vld [vmem:[%s8 + $0x18] sm:$0xff]
    %v1690 = vsel %vm1044, %v1463, 0
    %1692 = vmatprep.subr.mxu0 0.0
    %1693 = vmatpush1.msra.mxu0 0.0
    %1694 = vmatprep.subr.mxu0 0.0
    %1695 = vmatpush1.msra.mxu0 0.0
    %1696 = vmatprep.subr.mxu0 0.0
    %1697 = vmatpush1.msra.mxu0 0.0
    %1698 = vmatprep.subr.mxu0 0.0
    %1699 = vmatpush1.msra.mxu0 0.0
    %1700 = vmatprep.subr.mxu0 0.0
    %1701 = vmatpush1.msra.mxu0 0.0
    %1702 = vmatprep.subr.mxu0 0.0
    %1703 = vmatpush1.msra.mxu0 0.0
    %1704 = vmatprep.subr.mxu0 0.0
    %1705 = vmatpush1.msra.mxu0 0.0
    %1706 = vmatprep.subr.mxu0 0.0
    %1707 = vmatpush1.msra.mxu0 0.0
    %1708 = vmatprep.subr.mxu0 0.0
    %1709 = vmatpush1.msra.mxu0 0.0
    %1710 = vmatprep.subr.mxu0 0.0
    %1711 = vmatpush1.msra.mxu0 0.0
    %1712 = vmatprep.subr.mxu0 0.0
    %1713 = vmatpush1.msra.mxu0 0.0
    %1714 = vmatprep.subr.mxu0 0.0
    %1715 = vmatpush1.msra.mxu0 0.0
    %1716 = vmatprep.subr.mxu0 0.0
    %1717 = vmatpush1.msra.mxu0 0.0
    %1718 = vmatprep.subr.mxu0 0.0
    %1719 = vmatpush1.msra.mxu0 0.0
    %1720 = vmatprep.subr.mxu0 0.0
    %1721 = vmatpush1.msra.mxu0 0.0
    %1722 = vmatprep.subr.mxu0 0.0
    %1723 = vmatpush1.msra.mxu0 %v1685
    %1724 = vmatprep.subr.mxu0 0.0
    %1725 = vmatpush2.msra.mxu0 0.0
    %1726 = vmatprep.subr.mxu0 0.0
    %1727 = vmatpush2.msra.mxu0 0.0
    %1728 = vmatprep.subr.mxu0 0.0
    %1729 = vmatpush2.msra.mxu0 0.0
    %1730 = vmatprep.subr.mxu0 0.0
    %1731 = vmatpush2.msra.mxu0 0.0
    %1732 = vmatprep.subr.mxu0 0.0
    %1733 = vmatpush2.msra.mxu0 0.0
    %1734 = vmatprep.subr.mxu0 0.0
    %1735 = vmatpush2.msra.mxu0 0.0
    %1736 = vmatprep.subr.mxu0 0.0
    %1737 = vmatpush2.msra.mxu0 0.0
    %1738 = vmatprep.subr.mxu0 0.0
    %1739 = vmatpush2.msra.mxu0 0.0
    %1740 = vmatprep.subr.mxu0 0.0
    %1741 = vmatpush2.msra.mxu0 0.0
    %1742 = vmatprep.subr.mxu0 0.0
    %1743 = vmatpush2.msra.mxu0 0.0
    %1744 = vmatprep.subr.mxu0 0.0
    %1745 = vmatpush2.msra.mxu0 0.0
    %1746 = vmatprep.subr.mxu0 0.0
    %1747 = vmatpush2.msra.mxu0 0.0
    %1748 = vmatprep.subr.mxu0 0.0
    %1749 = vmatpush2.msra.mxu0 0.0
    %1750 = vmatprep.subr.mxu0 0.0
    %1751 = vmatpush2.msra.mxu0 0.0
    %1752 = vmatprep.subr.mxu0 0.0
    %1753 = vmatpush2.msra.mxu0 0.0
    %1754 = vmatprep.subr.mxu0 0.0
    %1755 = vmatpush2.msra.mxu0 0.0
    %1756 = vmatprep.mubr.f32.mxu0 0.0
    %1757 = vmatmul.mubr.f32.gmra.mxu0 %v1690
    %v1758 = vpop.f32.mrf.mxu0
    %v1759 = vadd.f32 0.0, %v1758
    %v1760 = vpop.f32.mrf.mxu0
    %1761 = vdwg.mxu0
    %v1763 = vsel %vm1044, %v1536, 0
    %1765 = vmatprep.subr.mxu0 0.0
    %1766 = vmatpush1.msra.mxu0 0.0
    %1767 = vmatprep.subr.mxu0 0.0
    %1768 = vmatpush1.msra.mxu0 0.0
    %1769 = vmatprep.subr.mxu0 0.0
    %1770 = vmatpush1.msra.mxu0 0.0
    %1771 = vmatprep.subr.mxu0 0.0
    %1772 = vmatpush1.msra.mxu0 0.0
    %1773 = vmatprep.subr.mxu0 0.0
    %1774 = vmatpush1.msra.mxu0 0.0
    %1775 = vmatprep.subr.mxu0 0.0
    %1776 = vmatpush1.msra.mxu0 0.0
    %1777 = vmatprep.subr.mxu0 0.0
    %1778 = vmatpush1.msra.mxu0 0.0
    %1779 = vmatprep.subr.mxu0 0.0
    %1780 = vmatpush1.msra.mxu0 0.0
    %1781 = vmatprep.subr.mxu0 0.0
    %1782 = vmatpush1.msra.mxu0 0.0
    %1783 = vmatprep.subr.mxu0 0.0
    %1784 = vmatpush1.msra.mxu0 0.0
    %1785 = vmatprep.subr.mxu0 0.0
    %1786 = vmatpush1.msra.mxu0 0.0
    %1787 = vmatprep.subr.mxu0 0.0
    %1788 = vmatpush1.msra.mxu0 0.0
    %1789 = vmatprep.subr.mxu0 0.0
    %1790 = vmatpush1.msra.mxu0 0.0
    %1791 = vmatprep.subr.mxu0 0.0
    %1792 = vmatpush1.msra.mxu0 0.0
    %1793 = vmatprep.subr.mxu0 0.0
    %1794 = vmatpush1.msra.mxu0 0.0
    %1795 = vmatprep.subr.mxu0 0.0
    %1796 = vmatpush1.msra.mxu0 %v1686
    %1797 = vmatprep.subr.mxu0 0.0
    %1798 = vmatpush2.msra.mxu0 0.0
    %1799 = vmatprep.subr.mxu0 0.0
    %1800 = vmatpush2.msra.mxu0 0.0
    %1801 = vmatprep.subr.mxu0 0.0
    %1802 = vmatpush2.msra.mxu0 0.0
    %1803 = vmatprep.subr.mxu0 0.0
    %1804 = vmatpush2.msra.mxu0 0.0
    %1805 = vmatprep.subr.mxu0 0.0
    %1806 = vmatpush2.msra.mxu0 0.0
    %1807 = vmatprep.subr.mxu0 0.0
    %1808 = vmatpush2.msra.mxu0 0.0
    %1809 = vmatprep.subr.mxu0 0.0
    %1810 = vmatpush2.msra.mxu0 0.0
    %1811 = vmatprep.subr.mxu0 0.0
    %1812 = vmatpush2.msra.mxu0 0.0
    %1813 = vmatprep.subr.mxu0 0.0
    %1814 = vmatpush2.msra.mxu0 0.0
    %1815 = vmatprep.subr.mxu0 0.0
    %1816 = vmatpush2.msra.mxu0 0.0
    %1817 = vmatprep.subr.mxu0 0.0
    %1818 = vmatpush2.msra.mxu0 0.0
    %1819 = vmatprep.subr.mxu0 0.0
    %1820 = vmatpush2.msra.mxu0 0.0
    %1821 = vmatprep.subr.mxu0 0.0
    %1822 = vmatpush2.msra.mxu0 0.0
    %1823 = vmatprep.subr.mxu0 0.0
    %1824 = vmatpush2.msra.mxu0 0.0
    %1825 = vmatprep.subr.mxu0 0.0
    %1826 = vmatpush2.msra.mxu0 0.0
    %1827 = vmatprep.subr.mxu0 0.0
    %1828 = vmatpush2.msra.mxu0 0.0
    %1829 = vmatprep.mubr.f32.mxu0 0.0
    %1830 = vmatmul.mubr.f32.gmra.mxu0 %v1763
    %v1831 = vpop.f32.mrf.mxu0
    %v1832 = vadd.f32 0.0, %v1831
    %v1833 = vpop.f32.mrf.mxu0
    %1834 = vdwg.mxu0
    %v1836 = vsel %vm1044, %v1609, 0
    %1838 = vmatprep.subr.mxu0 0.0
    %1839 = vmatpush1.msra.mxu0 0.0
    %1840 = vmatprep.subr.mxu0 0.0
    %1841 = vmatpush1.msra.mxu0 0.0
    %1842 = vmatprep.subr.mxu0 0.0
    %1843 = vmatpush1.msra.mxu0 0.0
    %1844 = vmatprep.subr.mxu0 0.0
    %1845 = vmatpush1.msra.mxu0 0.0
    %1846 = vmatprep.subr.mxu0 0.0
    %1847 = vmatpush1.msra.mxu0 0.0
    %1848 = vmatprep.subr.mxu0 0.0
    %1849 = vmatpush1.msra.mxu0 0.0
    %1850 = vmatprep.subr.mxu0 0.0
    %1851 = vmatpush1.msra.mxu0 0.0
    %1852 = vmatprep.subr.mxu0 0.0
    %1853 = vmatpush1.msra.mxu0 0.0
    %1854 = vmatprep.subr.mxu0 0.0
    %1855 = vmatpush1.msra.mxu0 0.0
    %1856 = vmatprep.subr.mxu0 0.0
    %1857 = vmatpush1.msra.mxu0 0.0
    %1858 = vmatprep.subr.mxu0 0.0
    %1859 = vmatpush1.msra.mxu0 0.0
    %1860 = vmatprep.subr.mxu0 0.0
    %1861 = vmatpush1.msra.mxu0 0.0
    %1862 = vmatprep.subr.mxu0 0.0
    %1863 = vmatpush1.msra.mxu0 0.0
    %1864 = vmatprep.subr.mxu0 0.0
    %1865 = vmatpush1.msra.mxu0 0.0
    %1866 = vmatprep.subr.mxu0 0.0
    %1867 = vmatpush1.msra.mxu0 0.0
    %1868 = vmatprep.subr.mxu0 0.0
    %1869 = vmatpush1.msra.mxu0 %v1687
    %1870 = vmatprep.subr.mxu0 0.0
    %1871 = vmatpush2.msra.mxu0 0.0
    %1872 = vmatprep.subr.mxu0 0.0
    %1873 = vmatpush2.msra.mxu0 0.0
    %1874 = vmatprep.subr.mxu0 0.0
    %1875 = vmatpush2.msra.mxu0 0.0
    %1876 = vmatprep.subr.mxu0 0.0
    %1877 = vmatpush2.msra.mxu0 0.0
    %1878 = vmatprep.subr.mxu0 0.0
    %1879 = vmatpush2.msra.mxu0 0.0
    %1880 = vmatprep.subr.mxu0 0.0
    %1881 = vmatpush2.msra.mxu0 0.0
    %1882 = vmatprep.subr.mxu0 0.0
    %1883 = vmatpush2.msra.mxu0 0.0
    %1884 = vmatprep.subr.mxu0 0.0
    %1885 = vmatpush2.msra.mxu0 0.0
    %1886 = vmatprep.subr.mxu0 0.0
    %1887 = vmatpush2.msra.mxu0 0.0
    %1888 = vmatprep.subr.mxu0 0.0
    %1889 = vmatpush2.msra.mxu0 0.0
    %1890 = vmatprep.subr.mxu0 0.0
    %1891 = vmatpush2.msra.mxu0 0.0
    %1892 = vmatprep.subr.mxu0 0.0
    %1893 = vmatpush2.msra.mxu0 0.0
    %1894 = vmatprep.subr.mxu0 0.0
    %1895 = vmatpush2.msra.mxu0 0.0
    %1896 = vmatprep.subr.mxu0 0.0
    %1897 = vmatpush2.msra.mxu0 0.0
    %1898 = vmatprep.subr.mxu0 0.0
    %1899 = vmatpush2.msra.mxu0 0.0
    %1900 = vmatprep.subr.mxu0 0.0
    %1901 = vmatpush2.msra.mxu0 0.0
    %1902 = vmatprep.mubr.f32.mxu0 0.0
    %1903 = vmatmul.mubr.f32.gmra.mxu0 %v1836
    %v1904 = vpop.f32.mrf.mxu0
    %v1905 = vadd.f32 0.0, %v1904
    %v1906 = vpop.f32.mrf.mxu0
    %1907 = vdwg.mxu0
    %v1909 = vsel %vm1044, %v1682, 0
    %1911 = vmatprep.subr.mxu0 0.0
    %1912 = vmatpush1.msra.mxu0 0.0
    %1913 = vmatprep.subr.mxu0 0.0
    %1914 = vmatpush1.msra.mxu0 0.0
    %1915 = vmatprep.subr.mxu0 0.0
    %1916 = vmatpush1.msra.mxu0 0.0
    %1917 = vmatprep.subr.mxu0 0.0
    %1918 = vmatpush1.msra.mxu0 0.0
    %1919 = vmatprep.subr.mxu0 0.0
    %1920 = vmatpush1.msra.mxu0 0.0
    %1921 = vmatprep.subr.mxu0 0.0
    %1922 = vmatpush1.msra.mxu0 0.0
    %1923 = vmatprep.subr.mxu0 0.0
    %1924 = vmatpush1.msra.mxu0 0.0
    %1925 = vmatprep.subr.mxu0 0.0
    %1926 = vmatpush1.msra.mxu0 0.0
    %1927 = vmatprep.subr.mxu0 0.0
    %1928 = vmatpush1.msra.mxu0 0.0
    %1929 = vmatprep.subr.mxu0 0.0
    %1930 = vmatpush1.msra.mxu0 0.0
    %1931 = vmatprep.subr.mxu0 0.0
    %1932 = vmatpush1.msra.mxu0 0.0
    %1933 = vmatprep.subr.mxu0 0.0
    %1934 = vmatpush1.msra.mxu0 0.0
    %1935 = vmatprep.subr.mxu0 0.0
    %1936 = vmatpush1.msra.mxu0 0.0
    %1937 = vmatprep.subr.mxu0 0.0
    %1938 = vmatpush1.msra.mxu0 0.0
    %1939 = vmatprep.subr.mxu0 0.0
    %1940 = vmatpush1.msra.mxu0 0.0
    %1941 = vmatprep.subr.mxu0 0.0
    %1942 = vmatpush1.msra.mxu0 %v1688
    %1943 = vmatprep.subr.mxu0 0.0
    %1944 = vmatpush2.msra.mxu0 0.0
    %1945 = vmatprep.subr.mxu0 0.0
    %1946 = vmatpush2.msra.mxu0 0.0
    %1947 = vmatprep.subr.mxu0 0.0
    %1948 = vmatpush2.msra.mxu0 0.0
    %1949 = vmatprep.subr.mxu0 0.0
    %1950 = vmatpush2.msra.mxu0 0.0
    %1951 = vmatprep.subr.mxu0 0.0
    %1952 = vmatpush2.msra.mxu0 0.0
    %1953 = vmatprep.subr.mxu0 0.0
    %1954 = vmatpush2.msra.mxu0 0.0
    %1955 = vmatprep.subr.mxu0 0.0
    %1956 = vmatpush2.msra.mxu0 0.0
    %1957 = vmatprep.subr.mxu0 0.0
    %1958 = vmatpush2.msra.mxu0 0.0
    %1959 = vmatprep.subr.mxu0 0.0
    %1960 = vmatpush2.msra.mxu0 0.0
    %1961 = vmatprep.subr.mxu0 0.0
    %1962 = vmatpush2.msra.mxu0 0.0
    %1963 = vmatprep.subr.mxu0 0.0
    %1964 = vmatpush2.msra.mxu0 0.0
    %1965 = vmatprep.subr.mxu0 0.0
    %1966 = vmatpush2.msra.mxu0 0.0
    %1967 = vmatprep.subr.mxu0 0.0
    %1968 = vmatpush2.msra.mxu0 0.0
    %1969 = vmatprep.subr.mxu0 0.0
    %1970 = vmatpush2.msra.mxu0 0.0
    %1971 = vmatprep.subr.mxu0 0.0
    %1972 = vmatpush2.msra.mxu0 0.0
    %1973 = vmatprep.subr.mxu0 0.0
    %1974 = vmatpush2.msra.mxu0 0.0
    %1975 = vmatprep.mubr.f32.mxu0 0.0
    %1976 = vmatmul.mubr.f32.gmra.mxu0 %v1909
    %v1977 = vpop.f32.mrf.mxu0
    %v1978 = vadd.f32 0.0, %v1977
    %v1979 = vpop.f32.mrf.mxu0
    %1980 = vdwg.mxu0
    %v1981 = vsel %vm109, %v1759, 0.0
    %v1982 = vsel %vm109, %v1832, 0.0
    %v1983 = vadd.f32 %v1981, %v1982
    %v1984 = vsel %vm109, %v1905, 0.0
    %v1985 = vadd.f32 %v1983, %v1984
    %v1986 = vsel %vm109, %v1978, 0.0
    %v1987 = vadd.f32 %v1985, %v1986
    %v1988 = vld [vmem:[%s9] sm:$0x1]
    %v1990 = vlaneseq
    %v1991 = vshrl.u32 %v1990, 7
    %v1992 = vsub.s32 0, %v1991
    %v1993 = vrot.slane %v1988, %v1992
    %v1995 = vadd.f32 %v1987, %v1993
    %v1996 = vadd.f32 %v63, %v1995
    %v1997 = vld [vmem:[%s10] sm:$0x1]
    %v1998 = vld [vmem:[%s11] sm:$0x1]
    %v1999 = vsel %vm109, %v1996, 0.0
    %2000 = vadd.xlane.f32.xlu0 %v1999
    %v2001 = vpop.xlane.xlu0 %2000
    %v2002 = vrcp.pop 32.0
    %v2003 = vmul.f32 %v2001, %v2002
    %v2004 = vsub.f32 %v1996, %v2003
    %v2005 = vmul.f32 %v2004, %v2004
    %v2006 = vsel %vm109, %v2005, 0.0
    %2007 = vadd.xlane.f32.xlu0 %v2006
    %v2008 = vpop.xlane.xlu0 %2007
    %v2009 = vmul.f32 %v2008, %v2002
    %v2010 = vadd.f32 %v2009, 1e-05
    %v2011 = vrsqrt.pop %v2010
    %v2012 = vmul.f32 %v2004, %v2011
    %v2014 = vlaneseq
    %v2015 = vshrl.u32 %v2014, 7
    %v2016 = vsub.s32 0, %v2015
    %v2017 = vrot.slane %v1997, %v2016
    %v2019 = vmul.f32 %v2012, %v2017
    %v2021 = vlaneseq
    %v2022 = vshrl.u32 %v2021, 7
    %v2023 = vsub.s32 0, %v2022
    %v2024 = vrot.slane %v1998, %v2023
    %v2026 = vadd.f32 %v2019, %v2024
    %v2027 = vld [vmem:[%s12] sm:$0xff]
    %v2028 = vld [vmem:[%s12 + $0x8] sm:$0xff]
    %v2029 = vld [vmem:[%s12 + $0x10] sm:$0xff]
    %v2030 = vld [vmem:[%s12 + $0x18] sm:$0xff]
    %v2031 = vld [vmem:[%s13] sm:$0x1]
    %v2033 = vlaneseq
    %v2034 = vshrl.u32 %v2033, 7
    %v2035 = vsub.s32 0, %v2034
    %v2036 = vrot.slane %v2031, %v2035
    %v2039 = vsel %vm109, %v2026, 0
    %2041 = vmatprep.subr.mxu0 0.0
    %2042 = vmatpush1.msra.mxu0 0.0
    %2043 = vmatprep.subr.mxu0 0.0
    %2044 = vmatpush1.msra.mxu0 0.0
    %2045 = vmatprep.subr.mxu0 0.0
    %2046 = vmatpush1.msra.mxu0 0.0
    %2047 = vmatprep.subr.mxu0 0.0
    %2048 = vmatpush1.msra.mxu0 0.0
    %2049 = vmatprep.subr.mxu0 0.0
    %2050 = vmatpush1.msra.mxu0 0.0
    %2051 = vmatprep.subr.mxu0 0.0
    %2052 = vmatpush1.msra.mxu0 0.0
    %2053 = vmatprep.subr.mxu0 0.0
    %2054 = vmatpush1.msra.mxu0 0.0
    %2055 = vmatprep.subr.mxu0 0.0
    %2056 = vmatpush1.msra.mxu0 0.0
    %2057 = vmatprep.subr.mxu0 0.0
    %2058 = vmatpush1.msra.mxu0 0.0
    %2059 = vmatprep.subr.mxu0 0.0
    %2060 = vmatpush1.msra.mxu0 0.0
    %2061 = vmatprep.subr.mxu0 0.0
    %2062 = vmatpush1.msra.mxu0 0.0
    %2063 = vmatprep.subr.mxu0 0.0
    %2064 = vmatpush1.msra.mxu0 0.0
    %2065 = vmatprep.subr.mxu0 0.0
    %2066 = vmatpush1.msra.mxu0 %v2030
    %2067 = vmatprep.subr.mxu0 0.0
    %2068 = vmatpush1.msra.mxu0 %v2029
    %2069 = vmatprep.subr.mxu0 0.0
    %2070 = vmatpush1.msra.mxu0 %v2028
    %2071 = vmatprep.subr.mxu0 0.0
    %2072 = vmatpush1.msra.mxu0 %v2027
    %2073 = vmatprep.subr.mxu0 0.0
    %2074 = vmatpush2.msra.mxu0 0.0
    %2075 = vmatprep.subr.mxu0 0.0
    %2076 = vmatpush2.msra.mxu0 0.0
    %2077 = vmatprep.subr.mxu0 0.0
    %2078 = vmatpush2.msra.mxu0 0.0
    %2079 = vmatprep.subr.mxu0 0.0
    %2080 = vmatpush2.msra.mxu0 0.0
    %2081 = vmatprep.subr.mxu0 0.0
    %2082 = vmatpush2.msra.mxu0 0.0
    %2083 = vmatprep.subr.mxu0 0.0
    %2084 = vmatpush2.msra.mxu0 0.0
    %2085 = vmatprep.subr.mxu0 0.0
    %2086 = vmatpush2.msra.mxu0 0.0
    %2087 = vmatprep.subr.mxu0 0.0
    %2088 = vmatpush2.msra.mxu0 0.0
    %2089 = vmatprep.subr.mxu0 0.0
    %2090 = vmatpush2.msra.mxu0 0.0
    %2091 = vmatprep.subr.mxu0 0.0
    %2092 = vmatpush2.msra.mxu0 0.0
    %2093 = vmatprep.subr.mxu0 0.0
    %2094 = vmatpush2.msra.mxu0 0.0
    %2095 = vmatprep.subr.mxu0 0.0
    %2096 = vmatpush2.msra.mxu0 0.0
    %2097 = vmatprep.subr.mxu0 0.0
    %2098 = vmatpush2.msra.mxu0 0.0
    %2099 = vmatprep.subr.mxu0 0.0
    %2100 = vmatpush2.msra.mxu0 0.0
    %2101 = vmatprep.subr.mxu0 0.0
    %2102 = vmatpush2.msra.mxu0 0.0
    %2103 = vmatprep.subr.mxu0 0.0
    %2104 = vmatpush2.msra.mxu0 0.0
    %2105 = vmatprep.mubr.f32.mxu0 0.0
    %2106 = vmatmul.mubr.f32.gmra.mxu0 %v2039
    %v2107 = vpop.f32.mrf.mxu0
    %v2108 = vadd.f32 %v2036, %v2107
    %v2109 = vpop.f32.mrf.mxu0
    %2110 = vdwg.mxu0
    %v2111 = vmul.f32 %v2108, 0.5
    %v2112 = vmul.f32 %v2108, 0.70710677
    %v2113 = verf.f32.pop %v2112
    %v2114 = vadd.f32 %v2113, 1.0
    %v2115 = vmul.f32 %v2111, %v2114
    %v2116 = vld [vmem:[%s14] sm:$0xff]
    %v2117 = vld [vmem:[%s14 + $0x8] sm:$0xff]
    %v2118 = vld [vmem:[%s14 + $0x10] sm:$0xff]
    %v2119 = vld [vmem:[%s14 + $0x18] sm:$0xff]
    %v2120 = vld [vmem:[%s14 + $0x20] sm:$0xff]
    %v2121 = vld [vmem:[%s14 + $0x28] sm:$0xff]
    %v2122 = vld [vmem:[%s14 + $0x30] sm:$0xff]
    %v2123 = vld [vmem:[%s14 + $0x38] sm:$0xff]
    %v2124 = vld [vmem:[%s14 + $0x40] sm:$0xff]
    %v2125 = vld [vmem:[%s14 + $0x48] sm:$0xff]
    %v2126 = vld [vmem:[%s14 + $0x50] sm:$0xff]
    %v2127 = vld [vmem:[%s14 + $0x58] sm:$0xff]
    %v2128 = vld [vmem:[%s14 + $0x60] sm:$0xff]
    %v2129 = vld [vmem:[%s14 + $0x68] sm:$0xff]
    %v2130 = vld [vmem:[%s14 + $0x70] sm:$0xff]
    %v2131 = vld [vmem:[%s14 + $0x78] sm:$0xff]
    %v2132 = vld [vmem:[%s15] sm:$0x1]
    %v2134 = vlaneseq
    %v2135 = vshrl.u32 %v2134, 7
    %v2136 = vsub.s32 0, %v2135
    %v2137 = vrot.slane %v2132, %v2136
    %2139 = vmatprep.subr.mxu0 0.0
    %2140 = vmatpush1.msra.mxu0 %v2131
    %2141 = vmatprep.subr.mxu0 0.0
    %2142 = vmatpush1.msra.mxu0 %v2130
    %2143 = vmatprep.subr.mxu0 0.0
    %2144 = vmatpush1.msra.mxu0 %v2129
    %2145 = vmatprep.subr.mxu0 0.0
    %2146 = vmatpush1.msra.mxu0 %v2128
    %2147 = vmatprep.subr.mxu0 0.0
    %2148 = vmatpush1.msra.mxu0 %v2127
    %2149 = vmatprep.subr.mxu0 0.0
    %2150 = vmatpush1.msra.mxu0 %v2126
    %2151 = vmatprep.subr.mxu0 0.0
    %2152 = vmatpush1.msra.mxu0 %v2125
    %2153 = vmatprep.subr.mxu0 0.0
    %2154 = vmatpush1.msra.mxu0 %v2124
    %2155 = vmatprep.subr.mxu0 0.0
    %2156 = vmatpush1.msra.mxu0 %v2123
    %2157 = vmatprep.subr.mxu0 0.0
    %2158 = vmatpush1.msra.mxu0 %v2122
    %2159 = vmatprep.subr.mxu0 0.0
    %2160 = vmatpush1.msra.mxu0 %v2121
    %2161 = vmatprep.subr.mxu0 0.0
    %2162 = vmatpush1.msra.mxu0 %v2120
    %2163 = vmatprep.subr.mxu0 0.0
    %2164 = vmatpush1.msra.mxu0 %v2119
    %2165 = vmatprep.subr.mxu0 0.0
    %2166 = vmatpush1.msra.mxu0 %v2118
    %2167 = vmatprep.subr.mxu0 0.0
    %2168 = vmatpush1.msra.mxu0 %v2117
    %2169 = vmatprep.subr.mxu0 0.0
    %2170 = vmatpush1.msra.mxu0 %v2116
    %2171 = vmatprep.subr.mxu0 0.0
    %2172 = vmatpush2.msra.mxu0 0.0
    %2173 = vmatprep.subr.mxu0 0.0
    %2174 = vmatpush2.msra.mxu0 0.0
    %2175 = vmatprep.subr.mxu0 0.0
    %2176 = vmatpush2.msra.mxu0 0.0
    %2177 = vmatprep.subr.mxu0 0.0
    %2178 = vmatpush2.msra.mxu0 0.0
    %2179 = vmatprep.subr.mxu0 0.0
    %2180 = vmatpush2.msra.mxu0 0.0
    %2181 = vmatprep.subr.mxu0 0.0
    %2182 = vmatpush2.msra.mxu0 0.0
    %2183 = vmatprep.subr.mxu0 0.0
    %2184 = vmatpush2.msra.mxu0 0.0
    %2185 = vmatprep.subr.mxu0 0.0
    %2186 = vmatpush2.msra.mxu0 0.0
    %2187 = vmatprep.subr.mxu0 0.0
    %2188 = vmatpush2.msra.mxu0 0.0
    %2189 = vmatprep.subr.mxu0 0.0
    %2190 = vmatpush2.msra.mxu0 0.0
    %2191 = vmatprep.subr.mxu0 0.0
    %2192 = vmatpush2.msra.mxu0 0.0
    %2193 = vmatprep.subr.mxu0 0.0
    %2194 = vmatpush2.msra.mxu0 0.0
    %2195 = vmatprep.subr.mxu0 0.0
    %2196 = vmatpush2.msra.mxu0 0.0
    %2197 = vmatprep.subr.mxu0 0.0
    %2198 = vmatpush2.msra.mxu0 0.0
    %2199 = vmatprep.subr.mxu0 0.0
    %2200 = vmatpush2.msra.mxu0 0.0
    %2201 = vmatprep.subr.mxu0 0.0
    %2202 = vmatpush2.msra.mxu0 0.0
    %2203 = vmatprep.mubr.f32.mxu0 0.0
    %2204 = vmatmul.mubr.f32.gmra.mxu0 %v2115
    %v2205 = vpop.f32.mrf.mxu0
    %v2206 = vadd.f32 %v2137, %v2205
    %v2207 = vpop.f32.mrf.mxu0
    %2208 = vdwg.mxu0
    %v2209 = vadd.f32 %v2026, %v2206
    %v2210 = vld [vmem:[%s16] sm:$0x1]
    %v2211 = vld [vmem:[%s17] sm:$0x1]
    %v2212 = vsel %vm109, %v2209, 0.0
    %2213 = vadd.xlane.f32.xlu0 %v2212
    %v2214 = vpop.xlane.xlu0 %2213
    %v2215 = vmul.f32 %v2214, %v2002
    %v2216 = vsub.f32 %v2209, %v2215
    %v2217 = vmul.f32 %v2216, %v2216
    %v2218 = vsel %vm109, %v2217, 0.0
    %2219 = vadd.xlane.f32.xlu0 %v2218
    %v2220 = vpop.xlane.xlu0 %2219
    %v2221 = vmul.f32 %v2220, %v2002
    %v2222 = vadd.f32 %v2221, 1e-05
    %v2223 = vrsqrt.pop %v2222
    %v2224 = vmul.f32 %v2216, %v2223
    %v2226 = vlaneseq
    %v2227 = vshrl.u32 %v2226, 7
    %v2228 = vsub.s32 0, %v2227
    %v2229 = vrot.slane %v2210, %v2228
    %v2231 = vmul.f32 %v2224, %v2229
    %v2233 = vlaneseq
    %v2234 = vshrl.u32 %v2233, 7
    %v2235 = vsub.s32 0, %v2234
    %v2236 = vrot.slane %v2211, %v2235
    %v2238 = vadd.f32 %v2231, %v2236
    %2239 = vst.msk [vmem:[#allocation2] sm:$0xff] %vm109, %v2238
    // Predicated region
    $region74: #{transformer_layer_forward.1} parent=1 // pred_check
      _
    $region75: #{transformer_layer_forward.1} parent=1 // pred_check_branch
      %2241 = sbr.rel (0) target = $region77
    $region76: #{transformer_layer_forward.1} parent=1 // pred_region
      %s2243 = ssub.s32 128, 128
      %2244 = vsyncadd [#allocation3], %s2243
      %s2246 = sshll.u32 [#allocation2], 4
      %s2247 = int_to_ptr.vmem [resolvable:$true] %s2246
      %2249 = dma.vmem_to_hbm [thread:$0]  %s2247, 128, %s18, [#allocation3]
    $region77: #{transformer_layer_forward.1} parent=1 // pred_fallthru
      _
    // Predicated region
    $region78: #{transformer_layer_forward.1} parent=1 // pred_check
      _
    $region79: #{transformer_layer_forward.1} parent=1 // pred_check_branch
      %2251 = sbr.rel (0) target = $region81
    $region80: #{transformer_layer_forward.1} parent=1 // pred_region
      %2252 = dma.done [#allocation3], 128
    $region81: #{transformer_layer_forward.1} parent=1 // pred_fallthru
      _
    %2253 = vsyncpa [#allocation3], 1

</llo_original>
